<compile_context>
chip_gen: v5e
topology: v5e:2x2
jax: 0.10.0
libtpu: 0.0.40
codegen_flags: <defaults>
</compile_context>

<pallas_src>
import functools
import math

import jax
import jax.numpy as jnp
from jax import lax
from jax.experimental import pallas as pl
from jax.experimental.pallas import tpu as pltpu


# ----------------------------- hardware-derived knobs -----------------------------

def _device_vmem_bytes():
    try:
        info = pltpu.get_tpu_info()
        for attr in ("vmem_capacity_bytes", "vmem_size_bytes", "vmem_bytes"):
            v = getattr(info, attr, None)
            if v:
                return int(v)
    except Exception:
        pass
    return 64 * 1024 * 1024          # conservative (v7x-sized) fallback


_VMEM_BYTES = _device_vmem_bytes()
_BIG_VMEM = _VMEM_BYTES >= 100 * 1024 * 1024          # v5e / v6e (128 MiB parts)
_VMEM_LIMIT = min(int(_VMEM_BYTES * 3 // 4), 100 * 1024 * 1024)

if _BIG_VMEM:
    _MM_TM, _MM_TN, _MM_TK = 512, 512, 1024
    _SEQ_CHUNK_CAP = 256
    _LN_ROW_CAP = 512
else:                                 # v7x (64 MiB VMEM) or unknown
    _MM_TM, _MM_TN, _MM_TK = 256, 256, 512
    _SEQ_CHUNK_CAP = 128
    _LN_ROW_CAP = 256

_SCAN_DINNER_CAP = 512                # d_inner block for the selective scan


# ----------------------------- small helpers -----------------------------

def _round_up(x, m):
    return ((x + m - 1) // m) * m


def _fit(dim, unit, max_tile):
    """Pad `dim` up to a tileable size and pick a tile <= max_tile dividing it."""
    p = _round_up(dim, unit)
    if p <= max_tile:
        return p, p
    return _round_up(p, max_tile), max_tile


def _pad2d(x, rows, cols):
    r, c = x.shape
    if (r, c) == (rows, cols):
        return x
    return jnp.pad(x, ((0, rows - r), (0, cols - c)))


# ----------------------------- in-kernel math -----------------------------

def _sigmoid(x):
    # numerically stable logistic; divide goes to the EUP via approx reciprocal
    e = jnp.exp(-jnp.abs(x))
    r = pl.reciprocal(1.0 + e, approx=True)
    return jnp.where(x >= 0, r, e * r)


def _softplus(x):
    # softplus matching torch's threshold=20 behavior; stable form (no exp overflow)
    safe = jnp.maximum(x, 0.0) + jnp.log(1.0 + jnp.exp(-jnp.abs(x)))
    return jnp.where(x > 20.0, x, safe)


# ----------------------------- Pallas kernels -----------------------------

def _matmul_kernel(*refs, activation, has_bias, has_residual):
    a_ref, b_ref = refs[0], refs[1]
    i = 2
    bias_ref = res_ref = None
    if has_bias:
        bias_ref = refs[i]; i += 1
    if has_residual:
        res_ref = refs[i]; i += 1
    o_ref, acc_ref = refs[i], refs[i + 1]

    @pl.when(pl.program_id(2) == 0)
    def _():
        acc_ref[...] = jnp.zeros_like(acc_ref)

    acc_ref[...] += jnp.dot(a_ref[...], b_ref[...],
                            preferred_element_type=jnp.float32)

    @pl.when(pl.program_id(2) == pl.num_programs(2) - 1)
    def _():
        out = acc_ref[...]
        if has_bias:
            out = out + bias_ref[...]
        if has_residual:
            out = out + res_ref[...].astype(jnp.float32)
        if activation == "relu":
            out = jnp.maximum(out, 0.0)
        o_ref[...] = out.astype(o_ref.dtype)


def _layernorm_kernel(x_ref, w_ref, b_ref, o_ref, *, eps):
    x = x_ref[...].astype(jnp.float32)
    mean = jnp.mean(x, axis=-1, keepdims=True)
    xc = x - mean
    var = jnp.mean(xc * xc, axis=-1, keepdims=True)
    out = xc * lax.rsqrt(var + eps) * w_ref[...] + b_ref[...]
    o_ref[...] = out.astype(o_ref.dtype)


def _causal_conv_silu_kernel(x_ref, w_ref, b_ref, o_ref, tail_ref):
    # One (batch, L-chunk) block of the depthwise causal conv1d + SiLU.
    # tail_ref carries only the last 8 rows of the previous chunk (zeros at the
    # first chunk == causal left zero padding).  Each tap is one roll of the
    # [tail; x] concatenation followed by a sublane-aligned slice.
    @pl.when(pl.program_id(1) == 0)
    def _():
        tail_ref[...] = jnp.zeros_like(tail_ref)

    x = x_ref[...].astype(jnp.float32)                # (CL, d_inner)
    tail = tail_ref[...]                              # (8, d_inner)
    w = w_ref[...]                                    # (d_conv, d_inner)
    d_conv = w.shape[0]
    cl = x.shape[0]
    t_rows = tail.shape[0]

    cat = jnp.concatenate([tail, x], axis=0)          # (8 + CL, d_inner)
    acc = x * w[d_conv - 1:d_conv, :] + b_ref[...]    # lag-0 tap + bias
    for lag in range(1, d_conv):                      # static tap unroll
        rolled = pltpu.roll(cat, shift=lag, axis=0)   # row (8+t) <- cat[8 + t - lag]
        acc = acc + rolled[t_rows:t_rows + cl, :] * w[d_conv - 1 - lag:d_conv - lag, :]
    o_ref[...] = (acc * _sigmoid(acc)).astype(o_ref.dtype)   # SiLU
    tail_ref[...] = x[cl - t_rows:, :]


def _selective_scan_kernel(u_ref, delta_ref, z_ref, b_ref, c_ref, at_ref,
                           d_ref, dtb_ref, y_ref, h_ref, *, chunk):
    # One (batch, d_inner-block, L-chunk) tile of the recurrence.  h_ref (VMEM
    # scratch, (d_state, dbl)) carries the SSM state across the innermost L-chunk
    # axis and is reset at l == 0 for each (batch, d_inner-block) pair.
    @pl.when(pl.program_id(2) == 0)
    def _():
        h_ref[...] = jnp.zeros_like(h_ref)

    a_t = at_ref[...].astype(jnp.float32)             # (d_state, dbl)
    d_vec = d_ref[...].astype(jnp.float32)            # (1, dbl)
    dtb = dtb_ref[...].astype(jnp.float32)            # (1, dbl)
    d_state, dbl = a_t.shape
    n_sub = u_ref.shape[0] // chunk

    def sub_body(s, h):                               # h: (d_state, dbl)
        start = pl.multiple_of(s * chunk, chunk)
        rows = pl.ds(start, chunk)
        # ---- vectorized pre-pass: all h-independent work hoisted off the chain ----
        u_c = u_ref[rows, :].astype(jnp.float32)                  # (chunk, dbl)
        dt_c = _softplus(delta_ref[rows, :].astype(jnp.float32) + dtb)
        dtu_c = dt_c * u_c
        du_c = d_vec * u_c
        z_c = z_ref[rows, :].astype(jnp.float32)
        gate_c = z_c * _sigmoid(z_c)                              # SiLU(z)
        bt_c = b_ref[s].astype(jnp.float32)                       # (chunk, d_state)
        ct_c = c_ref[s].astype(jnp.float32)                       # (chunk, d_state)
        dA_c = jnp.exp(a_t[None, :, :] * dt_c[:, None, :])        # (chunk, d_state, dbl)
        bu_c = bt_c[:, :, None] * dtu_c[:, None, :]               # (chunk, d_state, dbl)
        ctb_c = jnp.broadcast_to(ct_c[:, :, None], (chunk, d_state, dbl))
        # ---- serial recurrence: only h = dA*h + bu (+ off-chain C·h reduce) ----
        ys = []
        for j in range(chunk):                                    # bounded unroll (8)
            h = dA_c[j] * h + bu_c[j]
            ys.append(jnp.sum(ctb_c[j] * h, axis=0, keepdims=True))
        y_c = (jnp.concatenate(ys, axis=0) + du_c) * gate_c
        y_ref[rows, :] = y_c.astype(y_ref.dtype)                  # one aligned 8-row store
        return h

    h_ref[...] = lax.fori_loop(0, n_sub, sub_body, h_ref[...])


# ----------------------------- Pallas wrappers -----------------------------

def pallas_linear(x, w, b=None, residual=None, activation="none",
                  out_dtype=jnp.float32):
    """y = act(x @ w + b [+ residual]); bf16 MXU operands, f32 accumulation."""
    *lead, K = x.shape
    N = w.shape[1]
    x2 = x.reshape(-1, K)
    M = x2.shape[0]

    Mp, tm = _fit(M, 8, _MM_TM)
    Kp, tk = _fit(K, 128, _MM_TK)
    Np, tn = _fit(N, 128, _MM_TN)

    if x2.dtype != jnp.bfloat16:
        x2 = x2.astype(jnp.bfloat16)
    a = _pad2d(x2, Mp, Kp)
    wp = w if w.dtype == jnp.bfloat16 else w.astype(jnp.bfloat16)
    wp = _pad2d(wp, Kp, Np)

    in_specs = [pl.BlockSpec((tm, tk), lambda i, j, k: (i, k)),
                pl.BlockSpec((tk, tn), lambda i, j, k: (k, j))]
    operands = [a, wp]
    has_bias = b is not None
    if has_bias:
        operands.append(_pad2d(b.reshape(1, N).astype(jnp.float32), 1, Np))
        in_specs.append(pl.BlockSpec((1, tn), lambda i, j, k: (0, j)))
    has_residual = residual is not None
    if has_residual:
        r2 = residual.reshape(-1, N).astype(jnp.float32)
        operands.append(_pad2d(r2, Mp, Np))
        in_specs.append(pl.BlockSpec((tm, tn), lambda i, j, k: (i, j)))

    cost = pl.CostEstimate(
        flops=2 * Mp * Kp * Np, transcendentals=0,
        bytes_accessed=int(a.size * 2 + wp.size * 2 + Mp * Np * 4))

    out = pl.pallas_call(
        functools.partial(_matmul_kernel, activation=activation,
                          has_bias=has_bias, has_residual=has_residual),
        out_shape=jax.ShapeDtypeStruct((Mp, Np), out_dtype),
        grid=(Mp // tm, Np // tn, Kp // tk),
        in_specs=in_specs,
        out_specs=pl.BlockSpec((tm, tn), lambda i, j, k: (i, j)),
        scratch_shapes=[pltpu.VMEM((tm, tn), jnp.float32)],
        compiler_params=pltpu.CompilerParams(
            dimension_semantics=("parallel", "parallel", "arbitrary"),
            vmem_limit_bytes=_VMEM_LIMIT),
        cost_estimate=cost,
    )(*operands)
    return out[:M, :N].reshape(*lead, N)


def pallas_layernorm(x, w, b, eps=1e-5, out_dtype=jnp.float32):
    # TODO(synk): could be fused into the prologue of the following linear kernel.
    *lead, d = x.shape
    x2 = x.reshape(-1, d)
    M = x2.shape[0]
    Mp, tm = _fit(M, 8, _LN_ROW_CAP)
    xp = _pad2d(x2, Mp, d)
    out = pl.pallas_call(
        functools.partial(_layernorm_kernel, eps=eps),
        out_shape=jax.ShapeDtypeStruct((Mp, d), out_dtype),
        grid=(Mp // tm,),
        in_specs=[
            pl.BlockSpec((tm, d), lambda i: (i, 0)),
            pl.BlockSpec((1, d), lambda i: (0, 0)),
            pl.BlockSpec((1, d), lambda i: (0, 0)),
        ],
        out_specs=pl.BlockSpec((tm, d), lambda i: (i, 0)),
        compiler_params=pltpu.CompilerParams(
            dimension_semantics=("parallel",),
            vmem_limit_bytes=_VMEM_LIMIT),
    )(xp, w.reshape(1, d).astype(jnp.float32), b.reshape(1, d).astype(jnp.float32))
    return out[:M].reshape(*lead, d)


def pallas_causal_conv_silu(x, w, b, out_dtype=jnp.bfloat16):
    Bsz, L, d_inner = x.shape
    d_conv = w.shape[0]
    assert d_conv - 1 <= 8, "tail buffer holds 8 rows"
    Lp, CL = _fit(L, 8, _SEQ_CHUNK_CAP)
    xp = jnp.pad(x, ((0, 0), (0, Lp - L), (0, 0)))
    out = pl.pallas_call(
        _causal_conv_silu_kernel,
        out_shape=jax.ShapeDtypeStruct((Bsz, Lp, d_inner), out_dtype),
        grid=(Bsz, Lp // CL),
        in_specs=[
            pl.BlockSpec((None, CL, d_inner), lambda bi, li: (bi, li, 0)),
            pl.BlockSpec((d_conv, d_inner), lambda bi, li: (0, 0)),
            pl.BlockSpec((1, d_inner), lambda bi, li: (0, 0)),
        ],
        out_specs=pl.BlockSpec((None, CL, d_inner), lambda bi, li: (bi, li, 0)),
        scratch_shapes=[pltpu.VMEM((8, d_inner), jnp.float32)],
        compiler_params=pltpu.CompilerParams(
            dimension_semantics=("parallel", "arbitrary"),
            vmem_limit_bytes=_VMEM_LIMIT),
    )(xp, w.astype(jnp.float32), b.reshape(1, d_inner).astype(jnp.float32))
    return out[:, :L, :]


def pallas_selective_scan(u, delta, z, Bm, Cm, A_T, D, dt_bias,
                          out_dtype=jnp.bfloat16):
    Bsz, L, d_inner = u.shape
    d_state = A_T.shape[0]
    chunk = 8
    Lp, CL = _fit(L, chunk, _SEQ_CHUNK_CAP)
    if d_inner <= _SCAN_DINNER_CAP:
        Dp, DBL = d_inner, d_inner
    else:
        Dp = _round_up(d_inner, _SCAN_DINNER_CAP)
        DBL = _SCAN_DINNER_CAP

    def pad_feat(t):                      # (B, L, d_inner) -> (B, Lp, Dp)
        return jnp.pad(t, ((0, 0), (0, Lp - L), (0, Dp - t.shape[2])))

    def to_state_tiles(t):                # (B, L, d_state) -> (B, Lp//chunk, chunk, d_state)
        tp = jnp.pad(t, ((0, 0), (0, Lp - L), (0, 0)))
        return tp.reshape(Bsz, Lp // chunk, chunk, d_state)

    def pad_vec(v):                       # (d_inner,) -> (1, Dp)
        return jnp.pad(v.reshape(1, d_inner).astype(jnp.float32),
                       ((0, 0), (0, Dp - d_inner)))

    seq_spec = lambda: pl.BlockSpec((None, CL, DBL), lambda bi, di, li: (bi, li, di))
    st_spec = lambda: pl.BlockSpec((None, CL // chunk, chunk, d_state),
                                   lambda bi, di, li: (bi, li, 0, 0))

    cost = pl.CostEstimate(
        flops=int(10 * Bsz * Lp * d_state * Dp),
        transcendentals=int(Bsz * Lp * (d_state * Dp + 4 * Dp)),
        bytes_accessed=int(2 * Bsz * Lp * (5 * Dp + 2 * d_state)))

    out = pl.pallas_call(
        functools.partial(_selective_scan_kernel, chunk=chunk),
        out_shape=jax.ShapeDtypeStruct((Bsz, Lp, Dp), out_dtype),
        grid=(Bsz, Dp // DBL, Lp // CL),          # L innermost ("arbitrary")
        in_specs=[
            seq_spec(), seq_spec(), seq_spec(),                        # u, delta, z
            st_spec(), st_spec(),                                      # B, C tiles
            pl.BlockSpec((d_state, DBL), lambda bi, di, li: (0, di)),  # A^T
            pl.BlockSpec((1, DBL), lambda bi, di, li: (0, di)),        # D
            pl.BlockSpec((1, DBL), lambda bi, di, li: (0, di)),        # dt bias
        ],
        out_specs=seq_spec(),
        scratch_shapes=[pltpu.VMEM((d_state, DBL), jnp.float32)],
        compiler_params=pltpu.CompilerParams(
            dimension_semantics=("parallel", "parallel", "arbitrary"),
            vmem_limit_bytes=_VMEM_LIMIT),
        cost_estimate=cost,
    )(pad_feat(u), pad_feat(delta), pad_feat(z),
      to_state_tiles(Bm), to_state_tiles(Cm),
      _pad2d(A_T.astype(jnp.float32), d_state, Dp),
      pad_vec(D), pad_vec(dt_bias))
    return out[:, :L, :d_inner]


# ----------------------------- model (glue) -----------------------------

def mamba_layer(p, x_ln, residual):
    d_state, d_inner = p["A_T"].shape

    xz = pallas_linear(x_ln, p["in_proj_w"], out_dtype=jnp.bfloat16)
    xs, z = jnp.split(xz, 2, axis=-1)
    xc = pallas_causal_conv_silu(xs, p["conv_w"], p["conv_b"])          # conv1d + SiLU

    x_dbl = pallas_linear(xc, p["xproj_fused_w"], out_dtype=jnp.bfloat16)
    delta, Bm, Cm = jnp.split(x_dbl, [d_inner, d_inner + d_state], axis=-1)

    y = pallas_selective_scan(xc, delta, z, Bm, Cm,
                              p["A_T"], p["D"], p["dt_proj_b"])
    # residual add fused into the out_proj epilogue
    return pallas_linear(y, p["out_proj_w"], residual=residual,
                         out_dtype=jnp.float32)


def block_forward(p, x):
    h1 = pallas_layernorm(x, p["ln1_w"], p["ln1_b"], out_dtype=jnp.bfloat16)
    x = mamba_layer(p["mamba"], h1, residual=x)
    h2 = pallas_layernorm(x, p["ln2_w"], p["ln2_b"], out_dtype=jnp.bfloat16)
    h2 = pallas_linear(h2, p["ffn_w1"], activation="relu", out_dtype=jnp.bfloat16)
    # Dropout(0.0) == identity; residual add fused into the ffn_w2 epilogue.
    return pallas_linear(h2, p["ffn_w2"], residual=x, out_dtype=jnp.float32)


LOSS_WEIGHTS = (1.0, 1.0)


def _cross_entropy(logits2d, targets1d):
    lse = jax.scipy.special.logsumexp(logits2d, axis=-1)
    picked = jnp.take_along_axis(logits2d, targets1d[:, None], axis=-1)[:, 0]
    return jnp.mean(lse - picked)


def samba_forward(params, tokens, y=None, *, head_sizes, loss_weights=LOSS_WEIGHTS):
    # tokens: (B, L, n_vocab_parts) int32
    d_model = params["emb"][0].shape[1]
    emb = jnp.zeros(tokens.shape[:2] + (d_model,), jnp.float32)
    for i, table in enumerate(params["emb"]):
        emb = emb + jnp.take(table, tokens[:, :, i], axis=0)
    h = emb
    for layer_p in params["layers"]:
        h = block_forward(layer_p, h)
    hn = pallas_layernorm(h, params["lnf_w"], params["lnf_b"], out_dtype=jnp.bfloat16)

    # Fused LM head (weights concatenated once in preprocess_params).
    logits_all = pallas_linear(hn, params["head_w"], params["head_b"],
                               out_dtype=jnp.float32)
    cuts, acc = [], 0
    for s in head_sizes[:-1]:
        acc += s
        cuts.append(acc)
    logits_parts = list(jnp.split(logits_all, cuts, axis=-1))

    if y is None:
        loss = None
    else:
        loss = 0.0
        for i, logits in enumerate(logits_parts):
            bsz, t, v = logits.shape
            loss = loss + loss_weights[i] * _cross_entropy(
                logits.reshape(bsz * t, v), y[:, :, i].reshape(bsz * t))
    return logits_parts, loss
    # TODO(synk): generate()'s top-k multinomial sampling is host-side control flow
    # and is not implemented as a Pallas kernel.


# ----------------------------- parameter preprocessing -----------------------------

def preprocess_params(params):
    """One-time weight reshuffle: dt_proj fold, LM-head fusion, bf16 weight casts."""
    bf16 = lambda w: w.astype(jnp.bfloat16)
    fast = {
        "emb": params["emb"],
        "lnf_w": params["lnf_w"], "lnf_b": params["lnf_b"],
        "head_w": bf16(jnp.concatenate(params["head_w"], axis=1)),
        "head_b": jnp.concatenate(params["head_b"], axis=0),
        "layers": [],
    }
    for lp in params["layers"]:
        mp = lp["mamba"]
        dt_rank = mp["dt_proj_w"].shape[0]
        fused_xproj = jnp.concatenate(
            [mp["x_proj_w"][:, :dt_rank] @ mp["dt_proj_w"], mp["x_proj_w"][:, dt_rank:]],
            axis=1)                                   # (d_inner, d_inner + 2*d_state)
        fast["layers"].append({
            "ln1_w": lp["ln1_w"], "ln1_b": lp["ln1_b"],
            "ln2_w": lp["ln2_w"], "ln2_b": lp["ln2_b"],
            "ffn_w1": bf16(lp["ffn_w1"]), "ffn_w2": bf16(lp["ffn_w2"]),
            "mamba": {
                "in_proj_w": bf16(mp["in_proj_w"]),
                "conv_w": mp["conv_w"], "conv_b": mp["conv_b"],
                "xproj_fused_w": bf16(fused_xproj),
                "dt_proj_b": mp["dt_proj_b"],
                "A_T": mp["A_T"], "D": mp["D"],
                "out_proj_w": bf16(mp["out_proj_w"]),
            },
        })
    return fast


# ----------------------------- deterministic init -----------------------------

def init_params(key, *, vocab_sizes, d_model, d_state, d_conv, layer_count):
    d_inner = 2 * d_model
    dt_rank = math.ceil(d_model / 16)
    keys = iter(jax.random.split(key, 128))

    def nrm(shape, std=0.02):
        return std * jax.random.normal(next(keys), shape, jnp.float32)

    params = {
        "emb": [nrm((v, d_model)) for v in vocab_sizes],
        "layers": [],
        "lnf_w": jnp.ones((d_model,), jnp.float32),
        "lnf_b": jnp.zeros((d_model,), jnp.float32),
        "head_w": [nrm((d_model, v)) for v in vocab_sizes],
        "head_b": [jnp.zeros((v,), jnp.float32) for v in vocab_sizes],
    }
    for _ in range(layer_count):
        A = jnp.tile(jnp.arange(1, d_state + 1, dtype=jnp.float32)[None, :],
                     (d_inner, 1))                      # A = -exp(A_log)
        params["layers"].append({
            "ln1_w": jnp.ones((d_model,), jnp.float32),
            "ln1_b": jnp.zeros((d_model,), jnp.float32),
            "ln2_w": jnp.ones((d_model,), jnp.float32),
            "ln2_b": jnp.zeros((d_model,), jnp.float32),
            "ffn_w1": nrm((d_model, 4 * d_model)),
            "ffn_w2": nrm((4 * d_model, d_model)),
            "mamba": {
                "in_proj_w": nrm((d_model, 2 * d_inner)),
                "conv_w": nrm((d_conv, d_inner), std=0.1),
                "conv_b": jnp.zeros((d_inner,), jnp.float32),
                "x_proj_w": nrm((d_inner, dt_rank + 2 * d_state)),
                "dt_proj_w": nrm((dt_rank, d_inner)),
                "dt_proj_b": jnp.zeros((d_inner,), jnp.float32),  # zeroed by init_weights
                "A_T": -A.T,                                      # (d_state, d_inner)
                "D": jnp.ones((d_inner,), jnp.float32),
                "out_proj_w": nrm((d_inner, d_model)),
            },
        })
    return params


# ----------------------------- main -----------------------------

if __name__ == "__main__":
    vocab_sizes = (11, 7)
    d_model, d_state, d_conv, layer_count = 32, 8, 4, 2
    batch, seq = 2, 8

    key = jax.random.PRNGKey(0)
    pkey, tkey1, tkey2 = jax.random.split(key, 3)
    raw_params = init_params(pkey, vocab_sizes=vocab_sizes, d_model=d_model,
                             d_state=d_state, d_conv=d_conv, layer_count=layer_count)
    params = preprocess_params(raw_params)           # one-time, outside the jitted forward

    tok0 = jax.random.randint(tkey1, (batch, seq), 0, vocab_sizes[0])
    tok1 = jax.random.randint(tkey2, (batch, seq), 0, vocab_sizes[1])
    tokens = jnp.stack([tok0, tok1], axis=-1).astype(jnp.int32)   # (2, 8, 2)

    fwd = jax.jit(functools.partial(samba_forward, head_sizes=vocab_sizes))
    logits_parts, loss = fwd(params, tokens, None)
    for lg in logits_parts:
        jax.block_until_ready(lg)
    assert logits_parts[0].shape == (batch, seq, vocab_sizes[0])
    assert logits_parts[1].shape == (batch, seq, vocab_sizes[1])
    assert loss is None
    assert bool(jnp.all(jnp.isfinite(logits_parts[0])))
    assert bool(jnp.all(jnp.isfinite(logits_parts[1])))

    # also exercise the loss path (targets = inputs, just for shape semantics)
    _, loss_val = fwd(params, tokens, tokens)
    jax.block_until_ready(loss_val)
    assert loss_val.shape == ()
    assert bool(jnp.isfinite(loss_val))

    print("KERNEL_OK")
</pallas_src>

<mosaic_0001>
module attributes {stable_mosaic.version = 11 : i64} {
  func.func @_matmul_kernel(%arg0: i32, %arg1: i32, %arg2: i32, %arg3: memref<16x128xbf16, #tpu.memory_space<vmem>>, %arg4: memref<128x128xbf16, #tpu.memory_space<vmem>>, %arg5: memref<16x128xbf16, #tpu.memory_space<vmem>>, %arg6: memref<16x128xf32, #tpu.memory_space<vmem>>) attributes {dimension_semantics = [#tpu.dimension_semantics<parallel>, #tpu.dimension_semantics<parallel>, #tpu.dimension_semantics<arbitrary>], iteration_bounds = array<i64: 1, 1, 1>, scalar_prefetch = 0 : i64, scratch_operands = 1 : i64, tpu.core_type = #tpu.core_type<tc>, window_params = [{transform_indices = @transform_0, window_bounds = array<i64: 16, 128>}, {transform_indices = @transform_1, window_bounds = array<i64: 128, 128>}, {transform_indices = @transform_2, window_bounds = array<i64: 16, 128>}]} {
    %c0_i32 = arith.constant 0 : i32
    %0 = arith.cmpi eq, %arg2, %c0_i32 : i32
    %1 = arith.extui %0 : i1 to i32
    %c0_i32_0 = arith.constant 0 : i32
    %2 = arith.cmpi ne, %1, %c0_i32_0 : i32
    scf.if %2 {
      %cst_10 = arith.constant 0.000000e+00 : f32
      %12 = vector.broadcast %cst_10 : f32 to vector<16x128xf32>
      %c0_11 = arith.constant 0 : index
      %c0_12 = arith.constant 0 : index
      %13 = vector.load %arg6[%c0_11, %c0_12] : memref<16x128xf32, #tpu.memory_space<vmem>>, vector<16x128xf32>
      tpu.vector_store %arg6[%c0_11, %c0_12], %12 {strides = array<i32>} : memref<16x128xf32, #tpu.memory_space<vmem>>, vector<16x128xf32>,
    } else {
    }
    %c0 = arith.constant 0 : index
    %c0_1 = arith.constant 0 : index
    %3 = vector.load %arg6[%c0, %c0_1] : memref<16x128xf32, #tpu.memory_space<vmem>>, vector<16x128xf32>
    %c0_2 = arith.constant 0 : index
    %c0_3 = arith.constant 0 : index
    %4 = vector.load %arg3[%c0_2, %c0_3] : memref<16x128xbf16, #tpu.memory_space<vmem>>, vector<16x128xbf16>
    %c0_4 = arith.constant 0 : index
    %c0_5 = arith.constant 0 : index
    %5 = vector.load %arg4[%c0_4, %c0_5] : memref<128x128xbf16, #tpu.memory_space<vmem>>, vector<128x128xbf16>
    %cst = arith.constant dense<0.000000e+00> : vector<16x128xf32>
    %6 = tpu.matmul %4, %5, %cst {dimension_numbers = #tpu.dot_dimension_numbers<[1], [0], [0], [1], [0, 0, 1, 1], [], []>} : vector<16x128xbf16>, vector<128x128xbf16>, vector<16x128xf32> -> vector<16x128xf32>
    %7 = arith.addf %3, %6 : vector<16x128xf32>
    %c0_6 = arith.constant 0 : index
    %c0_7 = arith.constant 0 : index
    %8 = vector.load %arg6[%c0_6, %c0_7] : memref<16x128xf32, #tpu.memory_space<vmem>>, vector<16x128xf32>
    tpu.vector_store %arg6[%c0_6, %c0_7], %7 {strides = array<i32>} : memref<16x128xf32, #tpu.memory_space<vmem>>, vector<16x128xf32>,
    %c0_i32_8 = arith.constant 0 : i32
    %9 = arith.cmpi eq, %arg2, %c0_i32_8 : i32
    %10 = arith.extui %9 : i1 to i32
    %c0_i32_9 = arith.constant 0 : i32
    %11 = arith.cmpi ne, %10, %c0_i32_9 : i32
    scf.if %11 {
      %c0_10 = arith.constant 0 : index
      %c0_11 = arith.constant 0 : index
      %12 = vector.load %arg6[%c0_10, %c0_11] : memref<16x128xf32, #tpu.memory_space<vmem>>, vector<16x128xf32>
      %13 = arith.truncf %12 : vector<16x128xf32> to vector<16x128xbf16>
      %c0_12 = arith.constant 0 : index
      %c0_13 = arith.constant 0 : index
      %14 = vector.load %arg5[%c0_12, %c0_13] : memref<16x128xbf16, #tpu.memory_space<vmem>>, vector<16x128xbf16>
      tpu.vector_store %arg5[%c0_12, %c0_13], %13 {strides = array<i32>} : memref<16x128xbf16, #tpu.memory_space<vmem>>, vector<16x128xbf16>,
    } else {
    }
    return
  }
  func.func @transform_0(%arg0: i32, %arg1: i32, %arg2: i32) -> (i32, i32) {
    %c0_i32 = arith.constant 0 : i32
    return %arg0, %arg2 : i32, i32
  }
  func.func @transform_1(%arg0: i32, %arg1: i32, %arg2: i32) -> (i32, i32) {
    %c0_i32 = arith.constant 0 : i32
    return %arg2, %arg1 : i32, i32
  }
  func.func @transform_2(%arg0: i32, %arg1: i32, %arg2: i32) -> (i32, i32) {
    %c0_i32 = arith.constant 0 : i32
    return %arg0, %arg1 : i32, i32
  }
}

module attributes {stable_mosaic.version = 11 : i64} {
  func.func @_causal_conv_silu_kernel(%arg0: i32, %arg1: i32, %arg2: memref<1x8x64xbf16, #tpu.memory_space<vmem>>, %arg3: memref<4x64xf32, #tpu.memory_space<vmem>>, %arg4: memref<1x64xf32, #tpu.memory_space<vmem>>, %arg5: memref<1x8x64xbf16, #tpu.memory_space<vmem>>, %arg6: memref<8x64xf32, #tpu.memory_space<vmem>>) attributes {dimension_semantics = [#tpu.dimension_semantics<parallel>, #tpu.dimension_semantics<arbitrary>], iteration_bounds = array<i64: 2, 1>, scalar_prefetch = 0 : i64, scratch_operands = 1 : i64, tpu.core_type = #tpu.core_type<tc>, window_params = [{transform_indices = @transform_0, window_bounds = array<i64: 1, 8, 64>}, {pipeline_mode = #tpu.pipeline_mode<synchronous>, transform_indices = @transform_1, window_bounds = array<i64: 4, 64>}, {pipeline_mode = #tpu.pipeline_mode<synchronous>, transform_indices = @transform_2, window_bounds = array<i64: 1, 64>}, {transform_indices = @transform_3, window_bounds = array<i64: 1, 8, 64>}]} {
    %c0_i32 = arith.constant 0 : i32
    %0 = arith.cmpi eq, %arg1, %c0_i32 : i32
    %1 = arith.extui %0 : i1 to i32
    %c0_i32_0 = arith.constant 0 : i32
    %2 = arith.cmpi ne, %1, %c0_i32_0 : i32
    scf.if %2 {
      %cst_16 = arith.constant 0.000000e+00 : f32
      %50 = vector.broadcast %cst_16 : f32 to vector<8x64xf32>
      %c0_17 = arith.constant 0 : index
      %c0_18 = arith.constant 0 : index
      %51 = vector.load %arg6[%c0_17, %c0_18] : memref<8x64xf32, #tpu.memory_space<vmem>>, vector<8x64xf32>
      tpu.vector_store %arg6[%c0_17, %c0_18], %50 {strides = array<i32>} : memref<8x64xf32, #tpu.memory_space<vmem>>, vector<8x64xf32>,
    } else {
    }
    %c0 = arith.constant 0 : index
    %c0_1 = arith.constant 0 : index
    %c0_2 = arith.constant 0 : index
    %3 = vector.load %arg2[%c0, %c0_1, %c0_2] : memref<1x8x64xbf16, #tpu.memory_space<vmem>>, vector<1x8x64xbf16>
    %4 = vector.shape_cast %3 : vector<1x8x64xbf16> to vector<8x64xbf16>
    %5 = arith.extf %4 : vector<8x64xbf16> to vector<8x64xf32>
    %c0_3 = arith.constant 0 : index
    %c0_4 = arith.constant 0 : index
    %6 = vector.load %arg6[%c0_3, %c0_4] : memref<8x64xf32, #tpu.memory_space<vmem>>, vector<8x64xf32>
    %c0_5 = arith.constant 0 : index
    %c0_6 = arith.constant 0 : index
    %7 = vector.load %arg3[%c0_5, %c0_6] : memref<4x64xf32, #tpu.memory_space<vmem>>, vector<4x64xf32>
    %8 = tpu.concatenate %6, %5 in 0 : vector<8x64xf32>, vector<8x64xf32> -> vector<16x64xf32>
    %9 = vector.extract_strided_slice %7 {offsets = [3, 0], sizes = [1, 64], strides = [1, 1]} : vector<4x64xf32> to vector<1x64xf32>
    %10 = vector.broadcast %9 : vector<1x64xf32> to vector<8x64xf32>
    %11 = arith.mulf %5, %10 : vector<8x64xf32>
    %c0_7 = arith.constant 0 : index
    %c0_8 = arith.constant 0 : index
    %12 = vector.load %arg4[%c0_7, %c0_8] : memref<1x64xf32, #tpu.memory_space<vmem>>, vector<1x64xf32>
    %13 = vector.broadcast %12 : vector<1x64xf32> to vector<8x64xf32>
    %14 = arith.addf %11, %13 : vector<8x64xf32>
    %c1_i32 = arith.constant 1 : i32
    %15 = tpu.dynamic_rotate %8 by %c1_i32 dim 0 : vector<16x64xf32>, i32 -> vector<16x64xf32>
    %16 = vector.extract_strided_slice %15 {offsets = [8, 0], sizes = [8, 64], strides = [1, 1]} : vector<16x64xf32> to vector<8x64xf32>
    %17 = vector.extract_strided_slice %7 {offsets = [2, 0], sizes = [1, 64], strides = [1, 1]} : vector<4x64xf32> to vector<1x64xf32>
    %18 = vector.broadcast %17 : vector<1x64xf32> to vector<8x64xf32>
    %19 = arith.mulf %16, %18 : vector<8x64xf32>
    %20 = arith.addf %14, %19 : vector<8x64xf32>
    %c2_i32 = arith.constant 2 : i32
    %21 = tpu.dynamic_rotate %8 by %c2_i32 dim 0 : vector<16x64xf32>, i32 -> vector<16x64xf32>
    %22 = vector.extract_strided_slice %21 {offsets = [8, 0], sizes = [8, 64], strides = [1, 1]} : vector<16x64xf32> to vector<8x64xf32>
    %23 = vector.extract_strided_slice %7 {offsets = [1, 0], sizes = [1, 64], strides = [1, 1]} : vector<4x64xf32> to vector<1x64xf32>
    %24 = vector.broadcast %23 : vector<1x64xf32> to vector<8x64xf32>
    %25 = arith.mulf %22, %24 : vector<8x64xf32>
    %26 = arith.addf %20, %25 : vector<8x64xf32>
    %c3_i32 = arith.constant 3 : i32
    %27 = tpu.dynamic_rotate %8 by %c3_i32 dim 0 : vector<16x64xf32>, i32 -> vector<16x64xf32>
    %28 = vector.extract_strided_slice %27 {offsets = [8, 0], sizes = [8, 64], strides = [1, 1]} : vector<16x64xf32> to vector<8x64xf32>
    %29 = vector.extract_strided_slice %7 {offsets = [0, 0], sizes = [1, 64], strides = [1, 1]} : vector<4x64xf32> to vector<1x64xf32>
    %30 = vector.broadcast %29 : vector<1x64xf32> to vector<8x64xf32>
    %31 = arith.mulf %28, %30 : vector<8x64xf32>
    %32 = arith.addf %26, %31 : vector<8x64xf32>
    %33 = math.absf %32 : vector<8x64xf32>
    %cst = arith.constant 0.000000e+00 : f32
    %34 = vector.broadcast %cst : f32 to vector<8x64xf32>
    %35 = arith.subf %34, %33 : vector<8x64xf32>
    %36 = math.exp %35 : vector<8x64xf32>
    %cst_9 = arith.constant 1.000000e+00 : f32
    %37 = vector.broadcast %cst_9 : f32 to vector<8x64xf32>
    %38 = arith.addf %37, %36 : vector<8x64xf32>
    %39 = tpu.reciprocal %38 {approx = true} : vector<8x64xf32> -> vector<8x64xf32>
    %cst_10 = arith.constant 0.000000e+00 : f32
    %40 = vector.broadcast %cst_10 : f32 to vector<8x64xf32>
    %41 = arith.cmpf oge, %32, %40 : vector<8x64xf32>
    %42 = arith.mulf %36, %39 : vector<8x64xf32>
    %43 = arith.select %41, %39, %42 : vector<8x64xi1>, vector<8x64xf32>
    %44 = arith.mulf %32, %43 : vector<8x64xf32>
    %45 = arith.truncf %44 : vector<8x64xf32> to vector<8x64xbf16>
    %c0_11 = arith.constant 0 : index
    %c0_12 = arith.constant 0 : index
    %c0_13 = arith.constant 0 : index
    %46 = vector.load %arg5[%c0_11, %c0_12, %c0_13] : memref<1x8x64xbf16, #tpu.memory_space<vmem>>, vector<1x8x64xbf16>
    %47 = vector.shape_cast %46 : vector<1x8x64xbf16> to vector<8x64xbf16>
    %48 = vector.shape_cast %45 : vector<8x64xbf16> to vector<1x8x64xbf16>
    tpu.vector_store %arg5[%c0_11, %c0_12, %c0_13], %48 {strides = array<i32>} : memref<1x8x64xbf16, #tpu.memory_space<vmem>>, vector<1x8x64xbf16>,
    %c0_14 = arith.constant 0 : index
    %c0_15 = arith.constant 0 : index
    %49 = vector.load %arg6[%c0_14, %c0_15] : memref<8x64xf32, #tpu.memory_space<vmem>>, vector<8x64xf32>
    tpu.vector_store %arg6[%c0_14, %c0_15], %5 {strides = array<i32>} : memref<8x64xf32, #tpu.memory_space<vmem>>, vector<8x64xf32>,
    return
  }
  func.func @transform_0(%arg0: i32, %arg1: i32) -> (i32, i32, i32) {
    %c0_i32 = arith.constant 0 : i32
    %c0_i32_0 = arith.constant 0 : i32
    return %arg0, %arg1, %c0_i32 : i32, i32, i32
  }
  func.func @transform_1(%arg0: i32, %arg1: i32) -> (i32, i32) {
    %c0_i32 = arith.constant 0 : i32
    %c0_i32_0 = arith.constant 0 : i32
    %c0_i32_1 = arith.constant 0 : i32
    return %c0_i32, %c0_i32_0 : i32, i32
  }
  func.func @transform_2(%arg0: i32, %arg1: i32) -> (i32, i32) {
    %c0_i32 = arith.constant 0 : i32
    %c0_i32_0 = arith.constant 0 : i32
    %c0_i32_1 = arith.constant 0 : i32
    return %c0_i32, %c0_i32_0 : i32, i32
  }
  func.func @transform_3(%arg0: i32, %arg1: i32) -> (i32, i32, i32) {
    %c0_i32 = arith.constant 0 : i32
    %c0_i32_0 = arith.constant 0 : i32
    return %arg0, %arg1, %c0_i32 : i32, i32, i32
  }
}

module attributes {stable_mosaic.version = 11 : i64} {
  func.func @_layernorm_kernel(%arg0: i32, %arg1: memref<16x32xf32, #tpu.memory_space<vmem>>, %arg2: memref<1x32xf32, #tpu.memory_space<vmem>>, %arg3: memref<1x32xf32, #tpu.memory_space<vmem>>, %arg4: memref<16x32xbf16, #tpu.memory_space<vmem>>) attributes {dimension_semantics = [#tpu.dimension_semantics<parallel>], iteration_bounds = array<i64: 1>, scalar_prefetch = 0 : i64, scratch_operands = 0 : i64, tpu.core_type = #tpu.core_type<tc>, window_params = [{transform_indices = @transform_0, window_bounds = array<i64: 16, 32>}, {pipeline_mode = #tpu.pipeline_mode<synchronous>, transform_indices = @transform_1, window_bounds = array<i64: 1, 32>}, {pipeline_mode = #tpu.pipeline_mode<synchronous>, transform_indices = @transform_2, window_bounds = array<i64: 1, 32>}, {transform_indices = @transform_3, window_bounds = array<i64: 16, 32>}]} {
    %c0 = arith.constant 0 : index
    %c0_0 = arith.constant 0 : index
    %0 = vector.load %arg1[%c0, %c0_0] : memref<16x32xf32, #tpu.memory_space<vmem>>, vector<16x32xf32>
    %cst = arith.constant dense<0.000000e+00> : vector<16xf32>
    %1 = vector.multi_reduction <add>, %0, %cst [1] : vector<16x32xf32> to vector<16xf32>
    %2 = vector.shape_cast %1 : vector<16xf32> to vector<16x1xf32>
    %cst_1 = arith.constant 3.200000e+01 : f32
    %3 = vector.broadcast %cst_1 : f32 to vector<16x1xf32>
    %4 = arith.divf %2, %3 : vector<16x1xf32>
    %5 = vector.broadcast %4 : vector<16x1xf32> to vector<16x32xf32>
    %6 = arith.subf %0, %5 : vector<16x32xf32>
    %7 = arith.mulf %6, %6 : vector<16x32xf32>
    %cst_2 = arith.constant dense<0.000000e+00> : vector<16xf32>
    %8 = vector.multi_reduction <add>, %7, %cst_2 [1] : vector<16x32xf32> to vector<16xf32>
    %9 = vector.shape_cast %8 : vector<16xf32> to vector<16x1xf32>
    %cst_3 = arith.constant 3.200000e+01 : f32
    %10 = vector.broadcast %cst_3 : f32 to vector<16x1xf32>
    %11 = arith.divf %9, %10 : vector<16x1xf32>
    %cst_4 = arith.constant 9.99999974E-6 : f32
    %12 = vector.broadcast %cst_4 : f32 to vector<16x1xf32>
    %13 = arith.addf %11, %12 : vector<16x1xf32>
    %14 = math.rsqrt %13 : vector<16x1xf32>
    %15 = vector.broadcast %14 : vector<16x1xf32> to vector<16x32xf32>
    %16 = arith.mulf %6, %15 : vector<16x32xf32>
    %c0_5 = arith.constant 0 : index
    %c0_6 = arith.constant 0 : index
    %17 = vector.load %arg2[%c0_5, %c0_6] : memref<1x32xf32, #tpu.memory_space<vmem>>, vector<1x32xf32>
    %18 = vector.broadcast %17 : vector<1x32xf32> to vector<16x32xf32>
    %19 = arith.mulf %16, %18 : vector<16x32xf32>
    %c0_7 = arith.constant 0 : index
    %c0_8 = arith.constant 0 : index
    %20 = vector.load %arg3[%c0_7, %c0_8] : memref<1x32xf32, #tpu.memory_space<vmem>>, vector<1x32xf32>
    %21 = vector.broadcast %20 : vector<1x32xf32> to vector<16x32xf32>
    %22 = arith.addf %19, %21 : vector<16x32xf32>
    %23 = arith.truncf %22 : vector<16x32xf32> to vector<16x32xbf16>
    %c0_9 = arith.constant 0 : index
    %c0_10 = arith.constant 0 : index
    %24 = vector.load %arg4[%c0_9, %c0_10] : memref<16x32xbf16, #tpu.memory_space<vmem>>, vector<16x32xbf16>
    tpu.vector_store %arg4[%c0_9, %c0_10], %23 {strides = array<i32>} : memref<16x32xbf16, #tpu.memory_space<vmem>>, vector<16x32xbf16>,
    return
  }
  func.func @transform_0(%arg0: i32) -> (i32, i32) {
    %c0_i32 = arith.constant 0 : i32
    %c0_i32_0 = arith.constant 0 : i32
    return %arg0, %c0_i32 : i32, i32
  }
  func.func @transform_1(%arg0: i32) -> (i32, i32) {
    %c0_i32 = arith.constant 0 : i32
    %c0_i32_0 = arith.constant 0 : i32
    %c0_i32_1 = arith.constant 0 : i32
    return %c0_i32, %c0_i32_0 : i32, i32
  }
  func.func @transform_2(%arg0: i32) -> (i32, i32) {
    %c0_i32 = arith.constant 0 : i32
    %c0_i32_0 = arith.constant 0 : i32
    %c0_i32_1 = arith.constant 0 : i32
    return %c0_i32, %c0_i32_0 : i32, i32
  }
  func.func @transform_3(%arg0: i32) -> (i32, i32) {
    %c0_i32 = arith.constant 0 : i32
    %c0_i32_0 = arith.constant 0 : i32
    return %arg0, %c0_i32 : i32, i32
  }
}

module attributes {stable_mosaic.version = 11 : i64} {
  func.func @_selective_scan_kernel(%arg0: i32, %arg1: i32, %arg2: i32, %arg3: memref<1x8x64xbf16, #tpu.memory_space<vmem>>, %arg4: memref<1x8x64xbf16, #tpu.memory_space<vmem>>, %arg5: memref<1x8x64xbf16, #tpu.memory_space<vmem>>, %arg6: memref<1x1x8x8xbf16, #tpu.memory_space<vmem>>, %arg7: memref<1x1x8x8xbf16, #tpu.memory_space<vmem>>, %arg8: memref<8x64xf32, #tpu.memory_space<vmem>>, %arg9: memref<1x64xf32, #tpu.memory_space<vmem>>, %arg10: memref<1x64xf32, #tpu.memory_space<vmem>>, %arg11: memref<1x8x64xbf16, #tpu.memory_space<vmem>>, %arg12: memref<8x64xf32, #tpu.memory_space<vmem>>) attributes {dimension_semantics = [#tpu.dimension_semantics<parallel>, #tpu.dimension_semantics<parallel>, #tpu.dimension_semantics<arbitrary>], iteration_bounds = array<i64: 2, 1, 1>, scalar_prefetch = 0 : i64, scratch_operands = 1 : i64, tpu.core_type = #tpu.core_type<tc>, window_params = [{transform_indices = @transform_0, window_bounds = array<i64: 1, 8, 64>}, {transform_indices = @transform_1, window_bounds = array<i64: 1, 8, 64>}, {transform_indices = @transform_2, window_bounds = array<i64: 1, 8, 64>}, {transform_indices = @transform_3, window_bounds = array<i64: 1, 1, 8, 8>}, {transform_indices = @transform_4, window_bounds = array<i64: 1, 1, 8, 8>}, {transform_indices = @transform_5, window_bounds = array<i64: 8, 64>}, {transform_indices = @transform_6, window_bounds = array<i64: 1, 64>}, {transform_indices = @transform_7, window_bounds = array<i64: 1, 64>}, {transform_indices = @transform_8, window_bounds = array<i64: 1, 8, 64>}]} {
    %c0_i32 = arith.constant 0 : i32
    %0 = arith.cmpi eq, %arg2, %c0_i32 : i32
    %1 = arith.extui %0 : i1 to i32
    %c0_i32_0 = arith.constant 0 : i32
    %2 = arith.cmpi ne, %1, %c0_i32_0 : i32
    scf.if %2 {
      %cst_39 = arith.constant 0.000000e+00 : f32
      %170 = vector.broadcast %cst_39 : f32 to vector<8x64xf32>
      %c0_40 = arith.constant 0 : index
      %c0_41 = arith.constant 0 : index
      %171 = vector.load %arg12[%c0_40, %c0_41] : memref<8x64xf32, #tpu.memory_space<vmem>>, vector<8x64xf32>
      tpu.vector_store %arg12[%c0_40, %c0_41], %170 {strides = array<i32>} : memref<8x64xf32, #tpu.memory_space<vmem>>, vector<8x64xf32>,
    } else {
    }
    %c0 = arith.constant 0 : index
    %c0_1 = arith.constant 0 : index
    %3 = vector.load %arg8[%c0, %c0_1] : memref<8x64xf32, #tpu.memory_space<vmem>>, vector<8x64xf32>
    %c0_2 = arith.constant 0 : index
    %c0_3 = arith.constant 0 : index
    %4 = vector.load %arg9[%c0_2, %c0_3] : memref<1x64xf32, #tpu.memory_space<vmem>>, vector<1x64xf32>
    %c0_4 = arith.constant 0 : index
    %c0_5 = arith.constant 0 : index
    %5 = vector.load %arg10[%c0_4, %c0_5] : memref<1x64xf32, #tpu.memory_space<vmem>>, vector<1x64xf32>
    %c0_6 = arith.constant 0 : index
    %c0_7 = arith.constant 0 : index
    %6 = vector.load %arg12[%c0_6, %c0_7] : memref<8x64xf32, #tpu.memory_space<vmem>>, vector<8x64xf32>
    %c0_i32_8 = arith.constant 0 : i32
    %c8_i32 = arith.constant 8 : i32
    %7 = arith.muli %c0_i32_8, %c8_i32 : i32
    %8 = tpu.assume_multiple %7, 8 : i32
    %c0_9 = arith.constant 0 : index
    %9 = arith.index_cast %8 : i32 to index
    %c0_10 = arith.constant 0 : index
    %10 = vector.load %arg3[%c0_9, %9, %c0_10] : memref<1x8x64xbf16, #tpu.memory_space<vmem>>, vector<1x8x64xbf16>
    %11 = vector.shape_cast %10 : vector<1x8x64xbf16> to vector<8x64xbf16>
    %12 = arith.extf %11 : vector<8x64xbf16> to vector<8x64xf32>
    %c0_11 = arith.constant 0 : index
    %13 = arith.index_cast %8 : i32 to index
    %c0_12 = arith.constant 0 : index
    %14 = vector.load %arg4[%c0_11, %13, %c0_12] : memref<1x8x64xbf16, #tpu.memory_space<vmem>>, vector<1x8x64xbf16>
    %15 = vector.shape_cast %14 : vector<1x8x64xbf16> to vector<8x64xbf16>
    %16 = arith.extf %15 : vector<8x64xbf16> to vector<8x64xf32>
    %17 = vector.broadcast %5 : vector<1x64xf32> to vector<8x64xf32>
    %18 = arith.addf %16, %17 : vector<8x64xf32>
    %cst = arith.constant 0.000000e+00 : f32
    %19 = vector.broadcast %cst : f32 to vector<8x64xf32>
    %20 = arith.maximumf %18, %19 : vector<8x64xf32>
    %21 = math.absf %18 : vector<8x64xf32>
    %cst_13 = arith.constant 0.000000e+00 : f32
    %22 = vector.broadcast %cst_13 : f32 to vector<8x64xf32>
    %23 = arith.subf %22, %21 : vector<8x64xf32>
    %24 = math.exp %23 : vector<8x64xf32>
    %cst_14 = arith.constant 1.000000e+00 : f32
    %25 = vector.broadcast %cst_14 : f32 to vector<8x64xf32>
    %26 = arith.addf %25, %24 : vector<8x64xf32>
    %27 = math.log %26 : vector<8x64xf32>
    %28 = arith.addf %20, %27 : vector<8x64xf32>
    %cst_15 = arith.constant 2.000000e+01 : f32
    %29 = vector.broadcast %cst_15 : f32 to vector<8x64xf32>
    %30 = arith.cmpf ogt, %18, %29 : vector<8x64xf32>
    %31 = arith.select %30, %18, %28 : vector<8x64xi1>, vector<8x64xf32>
    %32 = arith.mulf %31, %12 : vector<8x64xf32>
    %33 = vector.broadcast %4 : vector<1x64xf32> to vector<8x64xf32>
    %34 = arith.mulf %33, %12 : vector<8x64xf32>
    %c0_16 = arith.constant 0 : index
    %35 = arith.index_cast %8 : i32 to index
    %c0_17 = arith.constant 0 : index
    %36 = vector.load %arg5[%c0_16, %35, %c0_17] : memref<1x8x64xbf16, #tpu.memory_space<vmem>>, vector<1x8x64xbf16>
    %37 = vector.shape_cast %36 : vector<1x8x64xbf16> to vector<8x64xbf16>
    %38 = arith.extf %37 : vector<8x64xbf16> to vector<8x64xf32>
    %39 = math.absf %38 : vector<8x64xf32>
    %cst_18 = arith.constant 0.000000e+00 : f32
    %40 = vector.broadcast %cst_18 : f32 to vector<8x64xf32>
    %41 = arith.subf %40, %39 : vector<8x64xf32>
    %42 = math.exp %41 : vector<8x64xf32>
    %cst_19 = arith.constant 1.000000e+00 : f32
    %43 = vector.broadcast %cst_19 : f32 to vector<8x64xf32>
    %44 = arith.addf %43, %42 : vector<8x64xf32>
    %45 = tpu.reciprocal %44 {approx = true} : vector<8x64xf32> -> vector<8x64xf32>
    %cst_20 = arith.constant 0.000000e+00 : f32
    %46 = vector.broadcast %cst_20 : f32 to vector<8x64xf32>
    %47 = arith.cmpf oge, %38, %46 : vector<8x64xf32>
    %48 = arith.mulf %42, %45 : vector<8x64xf32>
    %49 = arith.select %47, %45, %48 : vector<8x64xi1>, vector<8x64xf32>
    %50 = arith.mulf %38, %49 : vector<8x64xf32>
    %c0_21 = arith.constant 0 : index
    %51 = arith.index_cast %c0_i32_8 : i32 to index
    %c0_22 = arith.constant 0 : index
    %c0_23 = arith.constant 0 : index
    %52 = vector.load %arg6[%c0_21, %51, %c0_22, %c0_23] : memref<1x1x8x8xbf16, #tpu.memory_space<vmem>>, vector<1x1x8x8xbf16>
    %53 = vector.shape_cast %52 : vector<1x1x8x8xbf16> to vector<8x8xbf16>
    %54 = arith.extf %53 : vector<8x8xbf16> to vector<8x8xf32>
    %c0_24 = arith.constant 0 : index
    %55 = arith.index_cast %c0_i32_8 : i32 to index
    %c0_25 = arith.constant 0 : index
    %c0_26 = arith.constant 0 : index
    %56 = vector.load %arg7[%c0_24, %55, %c0_25, %c0_26] : memref<1x1x8x8xbf16, #tpu.memory_space<vmem>>, vector<1x1x8x8xbf16>
    %57 = vector.shape_cast %56 : vector<1x1x8x8xbf16> to vector<8x8xbf16>
    %58 = arith.extf %57 : vector<8x8xbf16> to vector<8x8xf32>
    %59 = vector.shape_cast %3 : vector<8x64xf32> to vector<1x8x64xf32>
    %60 = vector.shape_cast %31 : vector<8x64xf32> to vector<8x1x64xf32>
    %61 = vector.broadcast %59 : vector<1x8x64xf32> to vector<8x8x64xf32>
    %62 = vector.broadcast %60 : vector<8x1x64xf32> to vector<8x8x64xf32>
    %63 = arith.mulf %61, %62 : vector<8x8x64xf32>
    %64 = math.exp %63 : vector<8x8x64xf32>
    %65 = vector.shape_cast %54 : vector<8x8xf32> to vector<8x8x1xf32>
    %66 = vector.shape_cast %32 : vector<8x64xf32> to vector<8x1x64xf32>
    %67 = vector.broadcast %65 : vector<8x8x1xf32> to vector<8x8x64xf32>
    %68 = vector.broadcast %66 : vector<8x1x64xf32> to vector<8x8x64xf32>
    %69 = arith.mulf %67, %68 : vector<8x8x64xf32>
    %70 = vector.shape_cast %58 : vector<8x8xf32> to vector<8x8x1xf32>
    %71 = vector.shape_cast %70 : vector<8x8x1xf32> to vector<8x8x1xf32>
    %72 = vector.broadcast %71 : vector<8x8x1xf32> to vector<8x8x64xf32>
    %73 = vector.extract_strided_slice %64 {offsets = [0, 0, 0], sizes = [1, 8, 64], strides = [1, 1, 1]} : vector<8x8x64xf32> to vector<1x8x64xf32>
    %74 = vector.shape_cast %73 : vector<1x8x64xf32> to vector<8x64xf32>
    %75 = arith.mulf %74, %6 : vector<8x64xf32>
    %76 = vector.extract_strided_slice %69 {offsets = [0, 0, 0], sizes = [1, 8, 64], strides = [1, 1, 1]} : vector<8x8x64xf32> to vector<1x8x64xf32>
    %77 = vector.shape_cast %76 : vector<1x8x64xf32> to vector<8x64xf32>
    %78 = arith.addf %75, %77 : vector<8x64xf32>
    %79 = vector.extract_strided_slice %72 {offsets = [0, 0, 0], sizes = [1, 8, 64], strides = [1, 1, 1]} : vector<8x8x64xf32> to vector<1x8x64xf32>
    %80 = vector.shape_cast %79 : vector<1x8x64xf32> to vector<8x64xf32>
    %81 = arith.mulf %80, %78 : vector<8x64xf32>
    %cst_27 = arith.constant dense<0.000000e+00> : vector<64xf32>
    %82 = vector.multi_reduction <add>, %81, %cst_27 [0] : vector<8x64xf32> to vector<64xf32>
    %83 = vector.shape_cast %82 : vector<64xf32> to vector<1x64xf32>
    %84 = vector.extract_strided_slice %64 {offsets = [1, 0, 0], sizes = [1, 8, 64], strides = [1, 1, 1]} : vector<8x8x64xf32> to vector<1x8x64xf32>
    %85 = vector.shape_cast %84 : vector<1x8x64xf32> to vector<8x64xf32>
    %86 = arith.mulf %85, %78 : vector<8x64xf32>
    %87 = vector.extract_strided_slice %69 {offsets = [1, 0, 0], sizes = [1, 8, 64], strides = [1, 1, 1]} : vector<8x8x64xf32> to vector<1x8x64xf32>
    %88 = vector.shape_cast %87 : vector<1x8x64xf32> to vector<8x64xf32>
    %89 = arith.addf %86, %88 : vector<8x64xf32>
    %90 = vector.extract_strided_slice %72 {offsets = [1, 0, 0], sizes = [1, 8, 64], strides = [1, 1, 1]} : vector<8x8x64xf32> to vector<1x8x64xf32>
    %91 = vector.shape_cast %90 : vector<1x8x64xf32> to vector<8x64xf32>
    %92 = arith.mulf %91, %89 : vector<8x64xf32>
    %cst_28 = arith.constant dense<0.000000e+00> : vector<64xf32>
    %93 = vector.multi_reduction <add>, %92, %cst_28 [0] : vector<8x64xf32> to vector<64xf32>
    %94 = vector.shape_cast %93 : vector<64xf32> to vector<1x64xf32>
    %95 = vector.extract_strided_slice %64 {offsets = [2, 0, 0], sizes = [1, 8, 64], strides = [1, 1, 1]} : vector<8x8x64xf32> to vector<1x8x64xf32>
    %96 = vector.shape_cast %95 : vector<1x8x64xf32> to vector<8x64xf32>
    %97 = arith.mulf %96, %89 : vector<8x64xf32>
    %98 = vector.extract_strided_slice %69 {offsets = [2, 0, 0], sizes = [1, 8, 64], strides = [1, 1, 1]} : vector<8x8x64xf32> to vector<1x8x64xf32>
    %99 = vector.shape_cast %98 : vector<1x8x64xf32> to vector<8x64xf32>
    %100 = arith.addf %97, %99 : vector<8x64xf32>
    %101 = vector.extract_strided_slice %72 {offsets = [2, 0, 0], sizes = [1, 8, 64], strides = [1, 1, 1]} : vector<8x8x64xf32> to vector<1x8x64xf32>
    %102 = vector.shape_cast %101 : vector<1x8x64xf32> to vector<8x64xf32>
    %103 = arith.mulf %102, %100 : vector<8x64xf32>
    %cst_29 = arith.constant dense<0.000000e+00> : vector<64xf32>
    %104 = vector.multi_reduction <add>, %103, %cst_29 [0] : vector<8x64xf32> to vector<64xf32>
    %105 = vector.shape_cast %104 : vector<64xf32> to vector<1x64xf32>
    %106 = vector.extract_strided_slice %64 {offsets = [3, 0, 0], sizes = [1, 8, 64], strides = [1, 1, 1]} : vector<8x8x64xf32> to vector<1x8x64xf32>
    %107 = vector.shape_cast %106 : vector<1x8x64xf32> to vector<8x64xf32>
    %108 = arith.mulf %107, %100 : vector<8x64xf32>
    %109 = vector.extract_strided_slice %69 {offsets = [3, 0, 0], sizes = [1, 8, 64], strides = [1, 1, 1]} : vector<8x8x64xf32> to vector<1x8x64xf32>
    %110 = vector.shape_cast %109 : vector<1x8x64xf32> to vector<8x64xf32>
    %111 = arith.addf %108, %110 : vector<8x64xf32>
    %112 = vector.extract_strided_slice %72 {offsets = [3, 0, 0], sizes = [1, 8, 64], strides = [1, 1, 1]} : vector<8x8x64xf32> to vector<1x8x64xf32>
    %113 = vector.shape_cast %112 : vector<1x8x64xf32> to vector<8x64xf32>
    %114 = arith.mulf %113, %111 : vector<8x64xf32>
    %cst_30 = arith.constant dense<0.000000e+00> : vector<64xf32>
    %115 = vector.multi_reduction <add>, %114, %cst_30 [0] : vector<8x64xf32> to vector<64xf32>
    %116 = vector.shape_cast %115 : vector<64xf32> to vector<1x64xf32>
    %117 = vector.extract_strided_slice %64 {offsets = [4, 0, 0], sizes = [1, 8, 64], strides = [1, 1, 1]} : vector<8x8x64xf32> to vector<1x8x64xf32>
    %118 = vector.shape_cast %117 : vector<1x8x64xf32> to vector<8x64xf32>
    %119 = arith.mulf %118, %111 : vector<8x64xf32>
    %120 = vector.extract_strided_slice %69 {offsets = [4, 0, 0], sizes = [1, 8, 64], strides = [1, 1, 1]} : vector<8x8x64xf32> to vector<1x8x64xf32>
    %121 = vector.shape_cast %120 : vector<1x8x64xf32> to vector<8x64xf32>
    %122 = arith.addf %119, %121 : vector<8x64xf32>
    %123 = vector.extract_strided_slice %72 {offsets = [4, 0, 0], sizes = [1, 8, 64], strides = [1, 1, 1]} : vector<8x8x64xf32> to vector<1x8x64xf32>
    %124 = vector.shape_cast %123 : vector<1x8x64xf32> to vector<8x64xf32>
    %125 = arith.mulf %124, %122 : vector<8x64xf32>
    %cst_31 = arith.constant dense<0.000000e+00> : vector<64xf32>
    %126 = vector.multi_reduction <add>, %125, %cst_31 [0] : vector<8x64xf32> to vector<64xf32>
    %127 = vector.shape_cast %126 : vector<64xf32> to vector<1x64xf32>
    %128 = vector.extract_strided_slice %64 {offsets = [5, 0, 0], sizes = [1, 8, 64], strides = [1, 1, 1]} : vector<8x8x64xf32> to vector<1x8x64xf32>
    %129 = vector.shape_cast %128 : vector<1x8x64xf32> to vector<8x64xf32>
    %130 = arith.mulf %129, %122 : vector<8x64xf32>
    %131 = vector.extract_strided_slice %69 {offsets = [5, 0, 0], sizes = [1, 8, 64], strides = [1, 1, 1]} : vector<8x8x64xf32> to vector<1x8x64xf32>
    %132 = vector.shape_cast %131 : vector<1x8x64xf32> to vector<8x64xf32>
    %133 = arith.addf %130, %132 : vector<8x64xf32>
    %134 = vector.extract_strided_slice %72 {offsets = [5, 0, 0], sizes = [1, 8, 64], strides = [1, 1, 1]} : vector<8x8x64xf32> to vector<1x8x64xf32>
    %135 = vector.shape_cast %134 : vector<1x8x64xf32> to vector<8x64xf32>
    %136 = arith.mulf %135, %133 : vector<8x64xf32>
    %cst_32 = arith.constant dense<0.000000e+00> : vector<64xf32>
    %137 = vector.multi_reduction <add>, %136, %cst_32 [0] : vector<8x64xf32> to vector<64xf32>
    %138 = vector.shape_cast %137 : vector<64xf32> to vector<1x64xf32>
    %139 = vector.extract_strided_slice %64 {offsets = [6, 0, 0], sizes = [1, 8, 64], strides = [1, 1, 1]} : vector<8x8x64xf32> to vector<1x8x64xf32>
    %140 = vector.shape_cast %139 : vector<1x8x64xf32> to vector<8x64xf32>
    %141 = arith.mulf %140, %133 : vector<8x64xf32>
    %142 = vector.extract_strided_slice %69 {offsets = [6, 0, 0], sizes = [1, 8, 64], strides = [1, 1, 1]} : vector<8x8x64xf32> to vector<1x8x64xf32>
    %143 = vector.shape_cast %142 : vector<1x8x64xf32> to vector<8x64xf32>
    %144 = arith.addf %141, %143 : vector<8x64xf32>
    %145 = vector.extract_strided_slice %72 {offsets = [6, 0, 0], sizes = [1, 8, 64], strides = [1, 1, 1]} : vector<8x8x64xf32> to vector<1x8x64xf32>
    %146 = vector.shape_cast %145 : vector<1x8x64xf32> to vector<8x64xf32>
    %147 = arith.mulf %146, %144 : vector<8x64xf32>
    %cst_33 = arith.constant dense<0.000000e+00> : vector<64xf32>
    %148 = vector.multi_reduction <add>, %147, %cst_33 [0] : vector<8x64xf32> to vector<64xf32>
    %149 = vector.shape_cast %148 : vector<64xf32> to vector<1x64xf32>
    %150 = vector.extract_strided_slice %64 {offsets = [7, 0, 0], sizes = [1, 8, 64], strides = [1, 1, 1]} : vector<8x8x64xf32> to vector<1x8x64xf32>
    %151 = vector.shape_cast %150 : vector<1x8x64xf32> to vector<8x64xf32>
    %152 = arith.mulf %151, %144 : vector<8x64xf32>
    %153 = vector.extract_strided_slice %69 {offsets = [7, 0, 0], sizes = [1, 8, 64], strides = [1, 1, 1]} : vector<8x8x64xf32> to vector<1x8x64xf32>
    %154 = vector.shape_cast %153 : vector<1x8x64xf32> to vector<8x64xf32>
    %155 = arith.addf %152, %154 : vector<8x64xf32>
    %156 = vector.extract_strided_slice %72 {offsets = [7, 0, 0], sizes = [1, 8, 64], strides = [1, 1, 1]} : vector<8x8x64xf32> to vector<1x8x64xf32>
    %157 = vector.shape_cast %156 : vector<1x8x64xf32> to vector<8x64xf32>
    %158 = arith.mulf %157, %155 : vector<8x64xf32>
    %cst_34 = arith.constant dense<0.000000e+00> : vector<64xf32>
    %159 = vector.multi_reduction <add>, %158, %cst_34 [0] : vector<8x64xf32> to vector<64xf32>
    %160 = vector.shape_cast %159 : vector<64xf32> to vector<1x64xf32>
    %161 = tpu.concatenate %83, %94, %105, %116, %127, %138, %149, %160 in 0 : vector<1x64xf32>, vector<1x64xf32>, vector<1x64xf32>, vector<1x64xf32>, vector<1x64xf32>, vector<1x64xf32>, vector<1x64xf32>, vector<1x64xf32> -> vector<8x64xf32>
    %162 = arith.addf %161, %34 : vector<8x64xf32>
    %163 = arith.mulf %162, %50 : vector<8x64xf32>
    %164 = arith.truncf %163 : vector<8x64xf32> to vector<8x64xbf16>
    %c0_35 = arith.constant 0 : index
    %165 = arith.index_cast %8 : i32 to index
    %c0_36 = arith.constant 0 : index
    %166 = vector.load %arg11[%c0_35, %165, %c0_36] : memref<1x8x64xbf16, #tpu.memory_space<vmem>>, vector<1x8x64xbf16>
    %167 = vector.shape_cast %166 : vector<1x8x64xbf16> to vector<8x64xbf16>
    %168 = vector.shape_cast %164 : vector<8x64xbf16> to vector<1x8x64xbf16>
    tpu.vector_store %arg11[%c0_35, %165, %c0_36], %168 {strides = array<i32>} : memref<1x8x64xbf16, #tpu.memory_space<vmem>>, vector<1x8x64xbf16>,
    %c1_i32 = arith.constant 1 : i32
    %c0_37 = arith.constant 0 : index
    %c0_38 = arith.constant 0 : index
    %169 = vector.load %arg12[%c0_37, %c0_38] : memref<8x64xf32, #tpu.memory_space<vmem>>, vector<8x64xf32>
    tpu.vector_store %arg12[%c0_37, %c0_38], %155 {strides = array<i32>} : memref<8x64xf32, #tpu.memory_space<vmem>>, vector<8x64xf32>,
    return
  }
  func.func @transform_0(%arg0: i32, %arg1: i32, %arg2: i32) -> (i32, i32, i32) {
    %c0_i32 = arith.constant 0 : i32
    return %arg0, %arg2, %arg1 : i32, i32, i32
  }
  func.func @transform_1(%arg0: i32, %arg1: i32, %arg2: i32) -> (i32, i32, i32) {
    %c0_i32 = arith.constant 0 : i32
    return %arg0, %arg2, %arg1 : i32, i32, i32
  }
  func.func @transform_2(%arg0: i32, %arg1: i32, %arg2: i32) -> (i32, i32, i32) {
    %c0_i32 = arith.constant 0 : i32
    return %arg0, %arg2, %arg1 : i32, i32, i32
  }
  func.func @transform_3(%arg0: i32, %arg1: i32, %arg2: i32) -> (i32, i32, i32, i32) {
    %c0_i32 = arith.constant 0 : i32
    %c0_i32_0 = arith.constant 0 : i32
    %c0_i32_1 = arith.constant 0 : i32
    return %arg0, %arg2, %c0_i32, %c0_i32_0 : i32, i32, i32, i32
  }
  func.func @transform_4(%arg0: i32, %arg1: i32, %arg2: i32) -> (i32, i32, i32, i32) {
    %c0_i32 = arith.constant 0 : i32
    %c0_i32_0 = arith.constant 0 : i32
    %c0_i32_1 = arith.constant 0 : i32
    return %arg0, %arg2, %c0_i32, %c0_i32_0 : i32, i32, i32, i32
  }
  func.func @transform_5(%arg0: i32, %arg1: i32, %arg2: i32) -> (i32, i32) {
    %c0_i32 = arith.constant 0 : i32
    %c0_i32_0 = arith.constant 0 : i32
    return %c0_i32, %arg1 : i32, i32
  }
  func.func @transform_6(%arg0: i32, %arg1: i32, %arg2: i32) -> (i32, i32) {
    %c0_i32 = arith.constant 0 : i32
    %c0_i32_0 = arith.constant 0 : i32
    return %c0_i32, %arg1 : i32, i32
  }
  func.func @transform_7(%arg0: i32, %arg1: i32, %arg2: i32) -> (i32, i32) {
    %c0_i32 = arith.constant 0 : i32
    %c0_i32_0 = arith.constant 0 : i32
    return %c0_i32, %arg1 : i32, i32
  }
  func.func @transform_8(%arg0: i32, %arg1: i32, %arg2: i32) -> (i32, i32, i32) {
    %c0_i32 = arith.constant 0 : i32
    return %arg0, %arg2, %arg1 : i32, i32, i32
  }
}

module attributes {stable_mosaic.version = 11 : i64} {
  func.func @_matmul_kernel(%arg0: i32, %arg1: i32, %arg2: i32, %arg3: memref<16x128xbf16, #tpu.memory_space<vmem>>, %arg4: memref<128x128xbf16, #tpu.memory_space<vmem>>, %arg5: memref<16x128xbf16, #tpu.memory_space<vmem>>, %arg6: memref<16x128xf32, #tpu.memory_space<vmem>>) attributes {dimension_semantics = [#tpu.dimension_semantics<parallel>, #tpu.dimension_semantics<parallel>, #tpu.dimension_semantics<arbitrary>], iteration_bounds = array<i64: 1, 1, 1>, scalar_prefetch = 0 : i64, scratch_operands = 1 : i64, tpu.core_type = #tpu.core_type<tc>, window_params = [{transform_indices = @transform_0, window_bounds = array<i64: 16, 128>}, {transform_indices = @transform_1, window_bounds = array<i64: 128, 128>}, {transform_indices = @transform_2, window_bounds = array<i64: 16, 128>}]} {
    %c0_i32 = arith.constant 0 : i32
    %0 = arith.cmpi eq, %arg2, %c0_i32 : i32
    %1 = arith.extui %0 : i1 to i32
    %c0_i32_0 = arith.constant 0 : i32
    %2 = arith.cmpi ne, %1, %c0_i32_0 : i32
    scf.if %2 {
      %cst_10 = arith.constant 0.000000e+00 : f32
      %12 = vector.broadcast %cst_10 : f32 to vector<16x128xf32>
      %c0_11 = arith.constant 0 : index
      %c0_12 = arith.constant 0 : index
      %13 = vector.load %arg6[%c0_11, %c0_12] : memref<16x128xf32, #tpu.memory_space<vmem>>, vector<16x128xf32>
      tpu.vector_store %arg6[%c0_11, %c0_12], %12 {strides = array<i32>} : memref<16x128xf32, #tpu.memory_space<vmem>>, vector<16x128xf32>,
    } else {
    }
    %c0 = arith.constant 0 : index
    %c0_1 = arith.constant 0 : index
    %3 = vector.load %arg6[%c0, %c0_1] : memref<16x128xf32, #tpu.memory_space<vmem>>, vector<16x128xf32>
    %c0_2 = arith.constant 0 : index
    %c0_3 = arith.constant 0 : index
    %4 = vector.load %arg3[%c0_2, %c0_3] : memref<16x128xbf16, #tpu.memory_space<vmem>>, vector<16x128xbf16>
    %c0_4 = arith.constant 0 : index
    %c0_5 = arith.constant 0 : index
    %5 = vector.load %arg4[%c0_4, %c0_5] : memref<128x128xbf16, #tpu.memory_space<vmem>>, vector<128x128xbf16>
    %cst = arith.constant dense<0.000000e+00> : vector<16x128xf32>
    %6 = tpu.matmul %4, %5, %cst {dimension_numbers = #tpu.dot_dimension_numbers<[1], [0], [0], [1], [0, 0, 1, 1], [], []>} : vector<16x128xbf16>, vector<128x128xbf16>, vector<16x128xf32> -> vector<16x128xf32>
    %7 = arith.addf %3, %6 : vector<16x128xf32>
    %c0_6 = arith.constant 0 : index
    %c0_7 = arith.constant 0 : index
    %8 = vector.load %arg6[%c0_6, %c0_7] : memref<16x128xf32, #tpu.memory_space<vmem>>, vector<16x128xf32>
    tpu.vector_store %arg6[%c0_6, %c0_7], %7 {strides = array<i32>} : memref<16x128xf32, #tpu.memory_space<vmem>>, vector<16x128xf32>,
    %c0_i32_8 = arith.constant 0 : i32
    %9 = arith.cmpi eq, %arg2, %c0_i32_8 : i32
    %10 = arith.extui %9 : i1 to i32
    %c0_i32_9 = arith.constant 0 : i32
    %11 = arith.cmpi ne, %10, %c0_i32_9 : i32
    scf.if %11 {
      %c0_10 = arith.constant 0 : index
      %c0_11 = arith.constant 0 : index
      %12 = vector.load %arg6[%c0_10, %c0_11] : memref<16x128xf32, #tpu.memory_space<vmem>>, vector<16x128xf32>
      %cst_12 = arith.constant 0.000000e+00 : f32
      %13 = vector.broadcast %cst_12 : f32 to vector<16x128xf32>
      %14 = arith.maximumf %12, %13 : vector<16x128xf32>
      %15 = arith.truncf %14 : vector<16x128xf32> to vector<16x128xbf16>
      %c0_13 = arith.constant 0 : index
      %c0_14 = arith.constant 0 : index
      %16 = vector.load %arg5[%c0_13, %c0_14] : memref<16x128xbf16, #tpu.memory_space<vmem>>, vector<16x128xbf16>
      tpu.vector_store %arg5[%c0_13, %c0_14], %15 {strides = array<i32>} : memref<16x128xbf16, #tpu.memory_space<vmem>>, vector<16x128xbf16>,
    } else {
    }
    return
  }
  func.func @transform_0(%arg0: i32, %arg1: i32, %arg2: i32) -> (i32, i32) {
    %c0_i32 = arith.constant 0 : i32
    return %arg0, %arg2 : i32, i32
  }
  func.func @transform_1(%arg0: i32, %arg1: i32, %arg2: i32) -> (i32, i32) {
    %c0_i32 = arith.constant 0 : i32
    return %arg2, %arg1 : i32, i32
  }
  func.func @transform_2(%arg0: i32, %arg1: i32, %arg2: i32) -> (i32, i32) {
    %c0_i32 = arith.constant 0 : i32
    return %arg0, %arg1 : i32, i32
  }
}

module attributes {stable_mosaic.version = 11 : i64} {
  func.func @_matmul_kernel(%arg0: i32, %arg1: i32, %arg2: i32, %arg3: memref<16x128xbf16, #tpu.memory_space<vmem>>, %arg4: memref<128x128xbf16, #tpu.memory_space<vmem>>, %arg5: memref<16x128xf32, #tpu.memory_space<vmem>>, %arg6: memref<16x128xf32, #tpu.memory_space<vmem>>, %arg7: memref<16x128xf32, #tpu.memory_space<vmem>>) attributes {dimension_semantics = [#tpu.dimension_semantics<parallel>, #tpu.dimension_semantics<parallel>, #tpu.dimension_semantics<arbitrary>], iteration_bounds = array<i64: 1, 1, 1>, scalar_prefetch = 0 : i64, scratch_operands = 1 : i64, tpu.core_type = #tpu.core_type<tc>, window_params = [{transform_indices = @transform_0, window_bounds = array<i64: 16, 128>}, {transform_indices = @transform_1, window_bounds = array<i64: 128, 128>}, {transform_indices = @transform_2, window_bounds = array<i64: 16, 128>}, {transform_indices = @transform_3, window_bounds = array<i64: 16, 128>}]} {
    %c0_i32 = arith.constant 0 : i32
    %0 = arith.cmpi eq, %arg2, %c0_i32 : i32
    %1 = arith.extui %0 : i1 to i32
    %c0_i32_0 = arith.constant 0 : i32
    %2 = arith.cmpi ne, %1, %c0_i32_0 : i32
    scf.if %2 {
      %cst_10 = arith.constant 0.000000e+00 : f32
      %12 = vector.broadcast %cst_10 : f32 to vector<16x128xf32>
      %c0_11 = arith.constant 0 : index
      %c0_12 = arith.constant 0 : index
      %13 = vector.load %arg7[%c0_11, %c0_12] : memref<16x128xf32, #tpu.memory_space<vmem>>, vector<16x128xf32>
      tpu.vector_store %arg7[%c0_11, %c0_12], %12 {strides = array<i32>} : memref<16x128xf32, #tpu.memory_space<vmem>>, vector<16x128xf32>,
    } else {
    }
    %c0 = arith.constant 0 : index
    %c0_1 = arith.constant 0 : index
    %3 = vector.load %arg7[%c0, %c0_1] : memref<16x128xf32, #tpu.memory_space<vmem>>, vector<16x128xf32>
    %c0_2 = arith.constant 0 : index
    %c0_3 = arith.constant 0 : index
    %4 = vector.load %arg3[%c0_2, %c0_3] : memref<16x128xbf16, #tpu.memory_space<vmem>>, vector<16x128xbf16>
    %c0_4 = arith.constant 0 : index
    %c0_5 = arith.constant 0 : index
    %5 = vector.load %arg4[%c0_4, %c0_5] : memref<128x128xbf16, #tpu.memory_space<vmem>>, vector<128x128xbf16>
    %cst = arith.constant dense<0.000000e+00> : vector<16x128xf32>
    %6 = tpu.matmul %4, %5, %cst {dimension_numbers = #tpu.dot_dimension_numbers<[1], [0], [0], [1], [0, 0, 1, 1], [], []>} : vector<16x128xbf16>, vector<128x128xbf16>, vector<16x128xf32> -> vector<16x128xf32>
    %7 = arith.addf %3, %6 : vector<16x128xf32>
    %c0_6 = arith.constant 0 : index
    %c0_7 = arith.constant 0 : index
    %8 = vector.load %arg7[%c0_6, %c0_7] : memref<16x128xf32, #tpu.memory_space<vmem>>, vector<16x128xf32>
    tpu.vector_store %arg7[%c0_6, %c0_7], %7 {strides = array<i32>} : memref<16x128xf32, #tpu.memory_space<vmem>>, vector<16x128xf32>,
    %c0_i32_8 = arith.constant 0 : i32
    %9 = arith.cmpi eq, %arg2, %c0_i32_8 : i32
    %10 = arith.extui %9 : i1 to i32
    %c0_i32_9 = arith.constant 0 : i32
    %11 = arith.cmpi ne, %10, %c0_i32_9 : i32
    scf.if %11 {
      %c0_10 = arith.constant 0 : index
      %c0_11 = arith.constant 0 : index
      %12 = vector.load %arg7[%c0_10, %c0_11] : memref<16x128xf32, #tpu.memory_space<vmem>>, vector<16x128xf32>
      %c0_12 = arith.constant 0 : index
      %c0_13 = arith.constant 0 : index
      %13 = vector.load %arg5[%c0_12, %c0_13] : memref<16x128xf32, #tpu.memory_space<vmem>>, vector<16x128xf32>
      %14 = arith.addf %12, %13 : vector<16x128xf32>
      %c0_14 = arith.constant 0 : index
      %c0_15 = arith.constant 0 : index
      %15 = vector.load %arg6[%c0_14, %c0_15] : memref<16x128xf32, #tpu.memory_space<vmem>>, vector<16x128xf32>
      tpu.vector_store %arg6[%c0_14, %c0_15], %14 {strides = array<i32>} : memref<16x128xf32, #tpu.memory_space<vmem>>, vector<16x128xf32>,
    } else {
    }
    return
  }
  func.func @transform_0(%arg0: i32, %arg1: i32, %arg2: i32) -> (i32, i32) {
    %c0_i32 = arith.constant 0 : i32
    return %arg0, %arg2 : i32, i32
  }
  func.func @transform_1(%arg0: i32, %arg1: i32, %arg2: i32) -> (i32, i32) {
    %c0_i32 = arith.constant 0 : i32
    return %arg2, %arg1 : i32, i32
  }
  func.func @transform_2(%arg0: i32, %arg1: i32, %arg2: i32) -> (i32, i32) {
    %c0_i32 = arith.constant 0 : i32
    return %arg0, %arg1 : i32, i32
  }
  func.func @transform_3(%arg0: i32, %arg1: i32, %arg2: i32) -> (i32, i32) {
    %c0_i32 = arith.constant 0 : i32
    return %arg0, %arg1 : i32, i32
  }
}

module attributes {stable_mosaic.version = 11 : i64} {
  func.func @_matmul_kernel(%arg0: i32, %arg1: i32, %arg2: i32, %arg3: memref<16x128xbf16, #tpu.memory_space<vmem>>, %arg4: memref<128x128xbf16, #tpu.memory_space<vmem>>, %arg5: memref<1x128xf32, #tpu.memory_space<vmem>>, %arg6: memref<16x128xf32, #tpu.memory_space<vmem>>, %arg7: memref<16x128xf32, #tpu.memory_space<vmem>>) attributes {dimension_semantics = [#tpu.dimension_semantics<parallel>, #tpu.dimension_semantics<parallel>, #tpu.dimension_semantics<arbitrary>], iteration_bounds = array<i64: 1, 1, 1>, scalar_prefetch = 0 : i64, scratch_operands = 1 : i64, tpu.core_type = #tpu.core_type<tc>, window_params = [{transform_indices = @transform_0, window_bounds = array<i64: 16, 128>}, {transform_indices = @transform_1, window_bounds = array<i64: 128, 128>}, {transform_indices = @transform_2, window_bounds = array<i64: 1, 128>}, {transform_indices = @transform_3, window_bounds = array<i64: 16, 128>}]} {
    %c0_i32 = arith.constant 0 : i32
    %0 = arith.cmpi eq, %arg2, %c0_i32 : i32
    %1 = arith.extui %0 : i1 to i32
    %c0_i32_0 = arith.constant 0 : i32
    %2 = arith.cmpi ne, %1, %c0_i32_0 : i32
    scf.if %2 {
      %cst_10 = arith.constant 0.000000e+00 : f32
      %12 = vector.broadcast %cst_10 : f32 to vector<16x128xf32>
      %c0_11 = arith.constant 0 : index
      %c0_12 = arith.constant 0 : index
      %13 = vector.load %arg7[%c0_11, %c0_12] : memref<16x128xf32, #tpu.memory_space<vmem>>, vector<16x128xf32>
      tpu.vector_store %arg7[%c0_11, %c0_12], %12 {strides = array<i32>} : memref<16x128xf32, #tpu.memory_space<vmem>>, vector<16x128xf32>,
    } else {
    }
    %c0 = arith.constant 0 : index
    %c0_1 = arith.constant 0 : index
    %3 = vector.load %arg7[%c0, %c0_1] : memref<16x128xf32, #tpu.memory_space<vmem>>, vector<16x128xf32>
    %c0_2 = arith.constant 0 : index
    %c0_3 = arith.constant 0 : index
    %4 = vector.load %arg3[%c0_2, %c0_3] : memref<16x128xbf16, #tpu.memory_space<vmem>>, vector<16x128xbf16>
    %c0_4 = arith.constant 0 : index
    %c0_5 = arith.constant 0 : index
    %5 = vector.load %arg4[%c0_4, %c0_5] : memref<128x128xbf16, #tpu.memory_space<vmem>>, vector<128x128xbf16>
    %cst = arith.constant dense<0.000000e+00> : vector<16x128xf32>
    %6 = tpu.matmul %4, %5, %cst {dimension_numbers = #tpu.dot_dimension_numbers<[1], [0], [0], [1], [0, 0, 1, 1], [], []>} : vector<16x128xbf16>, vector<128x128xbf16>, vector<16x128xf32> -> vector<16x128xf32>
    %7 = arith.addf %3, %6 : vector<16x128xf32>
    %c0_6 = arith.constant 0 : index
    %c0_7 = arith.constant 0 : index
    %8 = vector.load %arg7[%c0_6, %c0_7] : memref<16x128xf32, #tpu.memory_space<vmem>>, vector<16x128xf32>
    tpu.vector_store %arg7[%c0_6, %c0_7], %7 {strides = array<i32>} : memref<16x128xf32, #tpu.memory_space<vmem>>, vector<16x128xf32>,
    %c0_i32_8 = arith.constant 0 : i32
    %9 = arith.cmpi eq, %arg2, %c0_i32_8 : i32
    %10 = arith.extui %9 : i1 to i32
    %c0_i32_9 = arith.constant 0 : i32
    %11 = arith.cmpi ne, %10, %c0_i32_9 : i32
    scf.if %11 {
      %c0_10 = arith.constant 0 : index
      %c0_11 = arith.constant 0 : index
      %12 = vector.load %arg7[%c0_10, %c0_11] : memref<16x128xf32, #tpu.memory_space<vmem>>, vector<16x128xf32>
      %c0_12 = arith.constant 0 : index
      %c0_13 = arith.constant 0 : index
      %13 = vector.load %arg5[%c0_12, %c0_13] : memref<1x128xf32, #tpu.memory_space<vmem>>, vector<1x128xf32>
      %14 = vector.broadcast %13 : vector<1x128xf32> to vector<16x128xf32>
      %15 = arith.addf %12, %14 : vector<16x128xf32>
      %c0_14 = arith.constant 0 : index
      %c0_15 = arith.constant 0 : index
      %16 = vector.load %arg6[%c0_14, %c0_15] : memref<16x128xf32, #tpu.memory_space<vmem>>, vector<16x128xf32>
      tpu.vector_store %arg6[%c0_14, %c0_15], %15 {strides = array<i32>} : memref<16x128xf32, #tpu.memory_space<vmem>>, vector<16x128xf32>,
    } else {
    }
    return
  }
  func.func @transform_0(%arg0: i32, %arg1: i32, %arg2: i32) -> (i32, i32) {
    %c0_i32 = arith.constant 0 : i32
    return %arg0, %arg2 : i32, i32
  }
  func.func @transform_1(%arg0: i32, %arg1: i32, %arg2: i32) -> (i32, i32) {
    %c0_i32 = arith.constant 0 : i32
    return %arg2, %arg1 : i32, i32
  }
  func.func @transform_2(%arg0: i32, %arg1: i32, %arg2: i32) -> (i32, i32) {
    %c0_i32 = arith.constant 0 : i32
    %c0_i32_0 = arith.constant 0 : i32
    return %c0_i32, %arg1 : i32, i32
  }
  func.func @transform_3(%arg0: i32, %arg1: i32, %arg2: i32) -> (i32, i32) {
    %c0_i32 = arith.constant 0 : i32
    return %arg0, %arg1 : i32, i32
  }
}

</mosaic_0001>

<llo_original>
// kernel: samba_forward.21
$region0: #{samba_forward.21}
  #allocation0 [shape = 'u32[]', space=smem, size = 0x4, offset = 0x4, fixed_abs, tag = 'smem constant byte address 0x4 - core index']
  #allocation1 [shape = 'u32[72,128]{1,0:T(1,128)}', space=vmem, size = 0x9000, scoped, tag = 'internal scratch']
  #allocation2 [shape = 'f32[16,128]{1,0:T(8,128)}', space=vmem, size = 0x2000, scoped, tag = 'scratch operand']
  %s0 = inlined_call_operand.vmem [shape: bf16[16,128], index: 0, kind: input, shape index: {}]
  %s1 = inlined_call_operand.vmem [shape: bf16[128,128], index: 1, kind: input, shape index: {}]
  %s2 = inlined_call_operand.vmem [shape: bf16[16,128], index: 2, kind: output, shape index: {}]
  %s3 = sld [smem:[#allocation0]]
  $region26: #{samba_forward.21} parent=0
    _
  %s5 = ssub.s32 1, %s3
  %s6 = scalar_select 0, %s5, %s3
  // Predicated region
  $region2: #{samba_forward.21} parent=0 // pred_check
    _
  $region3: #{samba_forward.21} parent=0 // pred_check_branch
    %8 = sbr.rel (0) target = $region5
  $region4: #{samba_forward.21} parent=0 // pred_region
    _
  $region5: #{samba_forward.21} parent=0 // pred_fallthru
    _
  // Predicated region
  $region6: #{samba_forward.21} parent=0 // pred_check
    _
  $region7: #{samba_forward.21} parent=0 // pred_check_branch
    %10 = sbr.rel (0) target = $region9
  $region8: #{samba_forward.21} parent=0 // pred_region
    _
  $region9: #{samba_forward.21} parent=0 // pred_fallthru
    _
  %p11 = scmp.eq.s32.totalorder 0, 0
  // Predicated region
  $region10: #{samba_forward.21} parent=0 // pred_check
    %p12 = pneg %p11
  $region11: #{samba_forward.21} parent=0 // pred_check_branch
    %14 = sbr.rel (%p12) target = $region13
  $region12: #{samba_forward.21} parent=0 // pred_region
    %15 = vst [vmem:[#allocation2] sm:$0xff] 0.0
    %16 = vst [vmem:[#allocation2 + $0x8] sm:$0xff] 0.0
  $region13: #{samba_forward.21} parent=0 // pred_fallthru
    _
  %v17 = vld [vmem:[#allocation2] sm:$0xff]
  %v18 = vld [vmem:[#allocation2 + $0x8] sm:$0xff]
  %v19 = vld [vmem:[%s0] sm:$0xf]
  %v20 = vld [vmem:[%s0 + $0x4] sm:$0xf]
  %v21 = vld [vmem:[%s1] sm:$0xf]
  %v22 = vld [vmem:[%s1 + $0x4] sm:$0xf]
  %v23 = vld [vmem:[%s1 + $0x8] sm:$0xf]
  %v24 = vld [vmem:[%s1 + $0xc] sm:$0xf]
  %v25 = vld [vmem:[%s1 + $0x10] sm:$0xf]
  %v26 = vld [vmem:[%s1 + $0x14] sm:$0xf]
  %v27 = vld [vmem:[%s1 + $0x18] sm:$0xf]
  %v28 = vld [vmem:[%s1 + $0x1c] sm:$0xf]
  %v29 = vld [vmem:[%s1 + $0x20] sm:$0xf]
  %v30 = vld [vmem:[%s1 + $0x24] sm:$0xf]
  %v31 = vld [vmem:[%s1 + $0x28] sm:$0xf]
  %v32 = vld [vmem:[%s1 + $0x2c] sm:$0xf]
  %v33 = vld [vmem:[%s1 + $0x30] sm:$0xf]
  %v34 = vld [vmem:[%s1 + $0x34] sm:$0xf]
  %v35 = vld [vmem:[%s1 + $0x38] sm:$0xf]
  %v36 = vld [vmem:[%s1 + $0x3c] sm:$0xf]
  %v39 = vunpack.c.l.b16 %v19
  %v40 = vunpack.c.l.b16 %v20
  %v41 = vpack.c.b16 %v40, %v39
  %v59 = vunpack.c.l.b16 %v21
  %v60 = vunpack.c.l.b16 %v22
  %v61 = vunpack.c.l.b16 %v23
  %v62 = vunpack.c.l.b16 %v24
  %v63 = vunpack.c.l.b16 %v25
  %v64 = vunpack.c.l.b16 %v26
  %v65 = vunpack.c.l.b16 %v27
  %v66 = vunpack.c.l.b16 %v28
  %v67 = vunpack.c.l.b16 %v29
  %v68 = vunpack.c.l.b16 %v30
  %v69 = vunpack.c.l.b16 %v31
  %v70 = vunpack.c.l.b16 %v32
  %v71 = vunpack.c.l.b16 %v33
  %v72 = vunpack.c.l.b16 %v34
  %v73 = vunpack.c.l.b16 %v35
  %v74 = vunpack.c.l.b16 %v36
  %v75 = vpack.c.b16 %v60, %v59
  %v76 = vpack.c.b16 %v62, %v61
  %v77 = vpack.c.b16 %v64, %v63
  %v78 = vpack.c.b16 %v66, %v65
  %v79 = vpack.c.b16 %v68, %v67
  %v80 = vpack.c.b16 %v70, %v69
  %v81 = vpack.c.b16 %v72, %v71
  %v82 = vpack.c.b16 %v74, %v73
  %91 = vmatpush.bf16.msra.mxu0 %v82
  %92 = vmatpush.bf16.msra.mxu0 %v81
  %93 = vmatpush.bf16.msra.mxu0 %v80
  %94 = vmatpush.bf16.msra.mxu0 %v79
  %95 = vmatpush.bf16.msra.mxu0 %v78
  %96 = vmatpush.bf16.msra.mxu0 %v77
  %97 = vmatpush.bf16.msra.mxu0 %v76
  %98 = vmatpush.bf16.msra.mxu0 %v75
  %99 = vmatmul.bf16.gmra.mxu0 %v41
  %v100 = vpop.f32.mrf.mxu0
  %v101 = vadd.f32 0.0, %v100
  %v102 = vpop.f32.mrf.mxu0
  %v103 = vadd.f32 0.0, %v102
  %104 = vdwg.mxu0
  %v105 = vadd.f32 %v17, %v101
  %v106 = vadd.f32 %v18, %v103
  %107 = vst [vmem:[#allocation2] sm:$0xff] %v105
  %108 = vst [vmem:[#allocation2 + $0x8] sm:$0xff] %v106
  // Predicated region
  $region14: #{samba_forward.21} parent=0 // pred_check
    %p109 = pneg %p11
  $region15: #{samba_forward.21} parent=0 // pred_check_branch
    %111 = sbr.rel (%p109) target = $region17
  $region16: #{samba_forward.21} parent=0 // pred_region
    %v112 = vld [vmem:[#allocation2] sm:$0xff]
    %v113 = vld [vmem:[#allocation2 + $0x8] sm:$0xff]
    %v114 = vpack.c.bf16 %v112, %v112
    %v115 = vpack.c.bf16 %v113, %v113
    %116 = vst [vmem:[%s2] sm:$0xf] %v114
    %117 = vst [vmem:[%s2 + $0x4] sm:$0xf] %v115
  $region17: #{samba_forward.21} parent=0 // pred_fallthru
    _
  // Predicated region
  $region18: #{samba_forward.21} parent=0 // pred_check
    _
  $region19: #{samba_forward.21} parent=0 // pred_check_branch
    %119 = sbr.rel (0) target = $region21
  $region20: #{samba_forward.21} parent=0 // pred_region
    _
  $region21: #{samba_forward.21} parent=0 // pred_fallthru
    _
  // Predicated region
  $region22: #{samba_forward.21} parent=0 // pred_check
    _
  $region23: #{samba_forward.21} parent=0 // pred_check_branch
    %121 = sbr.rel (0) target = $region25
  $region24: #{samba_forward.21} parent=0 // pred_region
    _
  $region25: #{samba_forward.21} parent=0 // pred_fallthru
    _

// kernel: samba_forward.22
$region0: #{samba_forward.22}
  #allocation0 [shape = 'u32[]', space=smem, size = 0x4, offset = 0x4, fixed_abs, tag = 'smem constant byte address 0x4 - core index']
  #allocation1 [shape = 'u32[72,128]{1,0:T(1,128)}', space=vmem, size = 0x9000, scoped, tag = 'internal scratch']
  #allocation2 [shape = 'f32[8,64]{1,0:T(8,128)}', space=vmem, size = 0x1000, scoped, tag = 'scratch operand']
  %s0 = inlined_call_operand.vmem [shape: bf16[2,8,64], index: 0, kind: input, shape index: {}]
  %s1 = inlined_call_operand.vmem [shape: f32[4,64], index: 1, kind: input, shape index: {}]
  %s2 = inlined_call_operand.vmem [shape: f32[1,64], index: 2, kind: input, shape index: {}]
  %s3 = inlined_call_operand.vmem [shape: bf16[2,8,64], index: 3, kind: output, shape index: {}]
  %s4 = sld [smem:[#allocation0]]
  $region49: #{samba_forward.22} parent=0
    _
  %s6 = ssub.s32 1, %s4
  %s7 = scalar_select 0, %s6, %s4
  loop: start=0, step=1, limit=4
  $region2: #{samba_forward.22} parent=0 // loop_pre_header
    _
  $region3: #{samba_forward.22} parent=0 // loop_header
    %s9 = sphi 0, %s13
    %p10 = scmp.ge.s32.totalorder %s9, 4
    %s16 = sphi 0, %s28
    %s17 = sphi 0, %s24
    %s18 = sphi 0, %s16
    %s19 = sphi 0, %s17
    %s20 = sphi 0, %s18
    %s21 = sphi 0, %s19
    %s33 = sphi 0, %s35
    %s36 = sphi 0, %s33
    %s37 = sphi 0, %s36
    %s53 = sphi 0, %s37
    %s57 = sphi 0, %s57
    %s59 = sphi 0, %s57
    %s60 = sphi 0, %s59
    %s74 = sphi 0, %s60
    %s78 = sphi 0, %s78
    %s80 = sphi 0, %s78
    %s81 = sphi 0, %s80
    %s95 = sphi 0, %s81
    %s103 = sphi 0, %s105
    %s106 = sphi 0, %s103
    %s107 = sphi 0, %s106
    %s123 = sphi 0, %s107
  $region4: #{samba_forward.22} parent=0 // loop_header_branch
    %12 = sbr.rel (%p10) target = $region8
  $region5: #{samba_forward.22} parent=0 // loop_body
    %s14 = ssub.s32 %s9, 1
    %s15 = ssub.s32 %s9, 2
    %s22 = sadd.s32 1, %s17
    %p23 = scmp.ge.s32.totalorder %s22, 1
    %s24 = scalar_select %p23, 0, %s22
    %s25 = sadd.s32 1, %s16
    %s26 = scalar_select %p23, %s25, %s16
    %p27 = scmp.ge.s32.totalorder %s26, 2
    %s28 = scalar_select %p27, 0, %s26
    %s29 = ssub.s32 %s16, %s28
    %s30 = ssub.s32 %s17, %s24
    %s31 = sor.u32 %s29, %s30
    %p32 = scmp.eq.s32.totalorder %s31, 0
    %s34 = sadd.s32 %s33, 1
    %s35 = scalar_select %p32, %s33, %s34
    %p38 = pneg %p32
    %p39 = scmp.eq.s32.totalorder %s9, 1
    %p40 = por %p38, %p39
    %p41 = scmp.ne.s32.totalorder %s33, %s36
    %p42 = scmp.eq.s32.totalorder %s9, 0
    %p43 = por %p41, %p42
    %p44 = scmp.ne.s32.totalorder %s33, %s36
    %p45 = scmp.eq.s32.totalorder %s14, 1
    %p46 = por %p44, %p45
    %p47 = scmp.ne.s32.totalorder %s36, %s37
    %p48 = scmp.eq.s32.totalorder %s14, 0
    %p49 = por %p47, %p48
    %p50 = scmp.ne.s32.totalorder %s36, %s37
    %p51 = scmp.eq.s32.totalorder %s15, 1
    %p52 = por %p50, %p51
    %p54 = scmp.ne.s32.totalorder %s37, %s53
    %p55 = scmp.eq.s32.totalorder %s15, 0
    %p56 = por %p54, %p55
    %s58 = sadd.s32 %s57, 1
    %p61 = scmp.eq.s32.totalorder %s9, 1
    %p62 = scmp.ne.s32.totalorder %s57, %s59
    %p63 = scmp.eq.s32.totalorder %s9, 0
    %p64 = por %p62, %p63
    %p65 = scmp.ne.s32.totalorder %s57, %s59
    %p66 = scmp.eq.s32.totalorder %s14, 1
    %p67 = por %p65, %p66
    %p68 = scmp.ne.s32.totalorder %s59, %s60
    %p69 = scmp.eq.s32.totalorder %s14, 0
    %p70 = por %p68, %p69
    %p71 = scmp.ne.s32.totalorder %s59, %s60
    %p72 = scmp.eq.s32.totalorder %s15, 1
    %p73 = por %p71, %p72
    %p75 = scmp.ne.s32.totalorder %s60, %s74
    %p76 = scmp.eq.s32.totalorder %s15, 0
    %p77 = por %p75, %p76
    %s79 = sadd.s32 %s78, 1
    %p82 = scmp.eq.s32.totalorder %s9, 1
    %p83 = scmp.ne.s32.totalorder %s78, %s80
    %p84 = scmp.eq.s32.totalorder %s9, 0
    %p85 = por %p83, %p84
    %p86 = scmp.ne.s32.totalorder %s78, %s80
    %p87 = scmp.eq.s32.totalorder %s14, 1
    %p88 = por %p86, %p87
    %p89 = scmp.ne.s32.totalorder %s80, %s81
    %p90 = scmp.eq.s32.totalorder %s14, 0
    %p91 = por %p89, %p90
    %p92 = scmp.ne.s32.totalorder %s80, %s81
    %p93 = scmp.eq.s32.totalorder %s15, 1
    %p94 = por %p92, %p93
    %p96 = scmp.ne.s32.totalorder %s81, %s95
    %p97 = scmp.eq.s32.totalorder %s15, 0
    %p98 = por %p96, %p97
    %s99 = ssub.s32 %s16, %s28
    %s100 = ssub.s32 %s17, %s24
    %s101 = sor.u32 %s99, %s100
    %p102 = scmp.eq.s32.totalorder %s101, 0
    %s104 = sadd.s32 %s103, 1
    %s105 = scalar_select %p102, %s103, %s104
    %p108 = pneg %p102
    %p109 = scmp.eq.s32.totalorder %s9, 1
    %p110 = por %p108, %p109
    %p111 = scmp.ne.s32.totalorder %s103, %s106
    %p112 = scmp.eq.s32.totalorder %s9, 0
    %p113 = por %p111, %p112
    %p114 = scmp.ne.s32.totalorder %s103, %s106
    %p115 = scmp.eq.s32.totalorder %s14, 1
    %p116 = por %p114, %p115
    %p117 = scmp.ne.s32.totalorder %s106, %s107
    %p118 = scmp.eq.s32.totalorder %s14, 0
    %p119 = por %p117, %p118
    %p120 = scmp.ne.s32.totalorder %s106, %s107
    %p121 = scmp.eq.s32.totalorder %s15, 1
    %p122 = por %p120, %p121
    %p124 = scmp.ne.s32.totalorder %s107, %s123
    %p125 = scmp.eq.s32.totalorder %s15, 0
    %p126 = por %p124, %p125
    %p127 = scmp.le.s32.totalorder 1, %s9
    %p128 = scmp.lt.s32.totalorder %s9, 3
    %p129 = pnand %p127, %p128
    %p130 = pneg %p129
    // Predicated region
    $region9: #{samba_forward.22} parent=5 // pred_check
      _
    $region10: #{samba_forward.22} parent=5 // pred_check_branch
      %132 = sbr.rel (%p129) target = $region12
    $region11: #{samba_forward.22} parent=5 // pred_region
      %s133 = ssub.s32 %s9, 1
      // Predicated region
      $region13: #{samba_forward.22} parent=11 // pred_check
        %p134 = pneg %p70
      $region14: #{samba_forward.22} parent=11 // pred_check_branch
        %136 = sbr.rel (%p134) target = $region16
      $region15: #{samba_forward.22} parent=11 // pred_region
        _
      $region16: #{samba_forward.22} parent=11 // pred_fallthru
        _
      // Predicated region
      $region17: #{samba_forward.22} parent=11 // pred_check
        %p137 = pneg %p91
      $region18: #{samba_forward.22} parent=11 // pred_check_branch
        %139 = sbr.rel (%p137) target = $region20
      $region19: #{samba_forward.22} parent=11 // pred_region
        _
      $region20: #{samba_forward.22} parent=11 // pred_fallthru
        _
    $region12: #{samba_forward.22} parent=5 // pred_fallthru
      _
    %p140 = scmp.lt.s32.totalorder %s9, 2
    // Predicated region
    $region21: #{samba_forward.22} parent=5 // pred_check
      %p141 = pneg %p140
    $region22: #{samba_forward.22} parent=5 // pred_check_branch
      %143 = sbr.rel (%p141) target = $region24
    $region23: #{samba_forward.22} parent=5 // pred_region
      // Predicated region
      $region25: #{samba_forward.22} parent=23 // pred_check
        %p144 = pneg %p43
      $region26: #{samba_forward.22} parent=23 // pred_check_branch
        %146 = sbr.rel (%p144) target = $region28
      $region27: #{samba_forward.22} parent=23 // pred_region
        %p147 = scmp.lt.s32.totalorder %s16, 1
        %s148 = scalar_select %p147, %s16, 1
        %p149 = scmp.lt.s32.totalorder %s17, 0
        %s150 = scalar_select %p149, %s17, 0
        %s151 = sadd.s32 %s150, %s148
        %s152 = smul.addr %s151, 4
        %s153 = scalar_lea.vmem %s0, %s152
      $region28: #{samba_forward.22} parent=23 // pred_fallthru
        _
    $region24: #{samba_forward.22} parent=5 // pred_fallthru
      _
    %p154 = scmp.le.s32.totalorder 1, %s9
    %p155 = scmp.lt.s32.totalorder %s9, 3
    %p156 = pnand %p154, %p155
    %p157 = pneg %p156
    // Predicated region
    $region29: #{samba_forward.22} parent=5 // pred_check
      _
    $region30: #{samba_forward.22} parent=5 // pred_check_branch
      %159 = sbr.rel (%p156) target = $region32
    $region31: #{samba_forward.22} parent=5 // pred_region
      %s160 = ssub.s32 %s9, 1
      %p161 = scmp.lt.s32.totalorder %s18, 1
      %s162 = scalar_select %p161, %s18, 1
      %p163 = scmp.lt.s32.totalorder %s19, 0
      %s164 = scalar_select %p163, %s19, 0
      %s165 = sadd.s32 %s164, %s162
      %s166 = smul.addr %s165, 4
      %s167 = scalar_lea.vmem %s0, %s166
      %p168 = pneg %p49
      %p169 = pneg %p46
      %p170 = pneg %p70
      %p171 = pneg %p67
      %p172 = pneg %p91
      %p173 = pneg %p88
      %p174 = pneg %p119
      %p175 = pneg %p116
      %p176 = scmp.lt.s32.totalorder %s18, 1
      %s177 = scalar_select %p176, %s18, 1
      %p178 = scmp.lt.s32.totalorder %s19, 0
      %s179 = scalar_select %p178, %s19, 0
      %s180 = sadd.s32 %s179, %s177
      %s181 = smul.addr %s180, 4
      %s182 = scalar_lea.vmem %s3, %s181
      %p183 = scmp.lt.s32.totalorder %s18, 1
      %s184 = scalar_select %p183, %s18, 1
      %p185 = scmp.lt.s32.totalorder %s19, 0
      %s186 = scalar_select %p185, %s19, 0
      %s187 = sadd.s32 %s186, %s184
      %s188 = smul.addr %s187, 4
      %s189 = scalar_lea.vmem %s0, %s188
      %p190 = scmp.lt.s32.totalorder %s18, 1
      %s191 = scalar_select %p190, %s18, 1
      %p192 = scmp.lt.s32.totalorder %s19, 0
      %s193 = scalar_select %p192, %s19, 0
      %s194 = sadd.s32 %s193, %s191
      %s195 = smul.addr %s194, 4
      %s196 = scalar_lea.vmem %s3, %s195
      %p197 = scmp.eq.s32.totalorder %s19, 0
      // Predicated region
      $region33: #{samba_forward.22} parent=31 // pred_check
        %p198 = pneg %p197
      $region34: #{samba_forward.22} parent=31 // pred_check_branch
        %200 = sbr.rel (%p198) target = $region36
      $region35: #{samba_forward.22} parent=31 // pred_region
        %vm201 = vcmask 523264
        %202 = vst.msk [vmem:[#allocation2] sm:$0xff] %vm201, 0.0
      $region36: #{samba_forward.22} parent=31 // pred_fallthru
        _
      %v203 = vld [vmem:[%s189] sm:$0xf]
      %v204 = vunpack.c.l.bf16 %v203
      %v205 = vld [vmem:[#allocation2] sm:$0xff]
      %v206 = vld [vmem:[%s1] sm:$0xf]
      %v207 = vperm.slane %v206, 3
      %v208 = vmul.f32 %v204, %v207
      %v209 = vld [vmem:[%s2] sm:$0x1]
      %v211 = vperm.slane %v209, 0
      %v213 = vadd.f32 %v208, %v211
      %v214 = vrot.slane %v205, 7
      %v215 = vrot.slane %v204, 7
      %v216 = vlaneseq
      %v217 = vshrl.u32 %v216, 7
      %vm218 = vcmp.lt.s32.totalorder %v217, 1
      %v219 = vsel %vm218, %v214, %v215
      %v220 = vperm.slane %v206, 2
      %v221 = vmul.f32 %v219, %v220
      %v222 = vadd.f32 %v213, %v221
      %v223 = vrot.slane %v205, 6
      %v224 = vrot.slane %v204, 6
      %vm225 = vcmp.lt.s32.totalorder %v217, 2
      %v226 = vsel %vm225, %v223, %v224
      %v227 = vperm.slane %v206, 1
      %v228 = vmul.f32 %v226, %v227
      %v229 = vadd.f32 %v222, %v228
      %v230 = vrot.slane %v205, 5
      %v231 = vrot.slane %v204, 5
      %vm232 = vcmp.lt.s32.totalorder %v217, 3
      %v233 = vsel %vm232, %v230, %v231
      %v234 = vperm.slane %v206, 0
      %v235 = vmul.f32 %v233, %v234
      %v236 = vadd.f32 %v229, %v235
      %v237 = vand.u32 2147483647, %v236
      %v238 = vsub.f32 0.0, %v237
      %v239 = vmul.f32 %v238, 1.442695
      %v240 = vpow.pop %v239
      %v241 = vadd.f32 %v240, 1.0
      %v242 = vrcp.pop %v241
      %vm243 = vcmp.ge.f32.partialorder %v236, 0.0
      %v244 = vmul.f32 %v240, %v242
      %v245 = vsel %vm243, %v242, %v244
      %v246 = vmul.f32 %v236, %v245
      %v247 = vpack.c.bf16 %v246, %v246
      %vm248 = vcmask 519168
      %249 = vst.msk [vmem:[%s196] sm:$0xf] %vm248, %v247
      %vm250 = vcmask 523264
      %251 = vst.msk [vmem:[#allocation2] sm:$0xff] %vm250, %v204
      %p252 = scmp.lt.s32.totalorder %s18, 1
      %s253 = scalar_select %p252, %s18, 1
      %p254 = scmp.lt.s32.totalorder %s19, 0
      %s255 = scalar_select %p254, %s19, 0
      %s256 = sadd.s32 %s255, %s253
      %s257 = smul.addr %s256, 4
      %s258 = scalar_lea.vmem %s3, %s257
      // Predicated region
      $region37: #{samba_forward.22} parent=31 // pred_check
        %p259 = pneg %p116
      $region38: #{samba_forward.22} parent=31 // pred_check_branch
        %261 = sbr.rel (%p259) target = $region40
      $region39: #{samba_forward.22} parent=31 // pred_region
        _
      $region40: #{samba_forward.22} parent=31 // pred_fallthru
        _
    $region32: #{samba_forward.22} parent=5 // pred_fallthru
      _
    %p262 = scmp.le.s32.totalorder 2, %s9
    // Predicated region
    $region41: #{samba_forward.22} parent=5 // pred_check
      %p263 = pneg %p262
    $region42: #{samba_forward.22} parent=5 // pred_check_branch
      %265 = sbr.rel (%p263) target = $region44
    $region43: #{samba_forward.22} parent=5 // pred_region
      %s266 = ssub.s32 %s9, 2
      // Predicated region
      $region45: #{samba_forward.22} parent=43 // pred_check
        %p267 = pneg %p122
      $region46: #{samba_forward.22} parent=43 // pred_check_branch
        %269 = sbr.rel (%p267) target = $region48
      $region47: #{samba_forward.22} parent=43 // pred_region
        %p270 = scmp.lt.s32.totalorder %s20, 1
        %s271 = scalar_select %p270, %s20, 1
        %p272 = scmp.lt.s32.totalorder %s21, 0
        %s273 = scalar_select %p272, %s21, 0
        %s274 = sadd.s32 %s273, %s271
        %s275 = smul.addr %s274, 4
        %s276 = scalar_lea.vmem %s3, %s275
      $region48: #{samba_forward.22} parent=43 // pred_fallthru
        _
    $region44: #{samba_forward.22} parent=5 // pred_fallthru
      _
  $region6: #{samba_forward.22} parent=0 // loop_footer
    %s13 = sadd.s32 1, %s9
  $region7: #{samba_forward.22} parent=0 // loop_footer_branch
    %8 = sbr.rel target = $region3
  $region8: #{samba_forward.22} parent=0 // loop_exit
    _

// kernel: samba_forward.20
$region0: #{samba_forward.20}
  #allocation0 [shape = 'u32[]', space=smem, size = 0x4, offset = 0x4, fixed_abs, tag = 'smem constant byte address 0x4 - core index']
  #allocation1 [shape = 'u32[72,128]{1,0:T(1,128)}', space=vmem, size = 0x9000, scoped, tag = 'internal scratch']
  %s0 = inlined_call_operand.vmem [shape: f32[16,32], index: 0, kind: input, shape index: {}]
  %s1 = inlined_call_operand.vmem [shape: f32[1,32], index: 1, kind: input, shape index: {}]
  %s2 = inlined_call_operand.vmem [shape: f32[1,32], index: 2, kind: input, shape index: {}]
  %s3 = inlined_call_operand.vmem [shape: bf16[16,32], index: 3, kind: output, shape index: {}]
  %s4 = sld [smem:[#allocation0]]
  $region22: #{samba_forward.20} parent=0
    _
  %s6 = ssub.s32 1, %s4
  %s7 = scalar_select 0, %s6, %s4
  // Predicated region
  $region2: #{samba_forward.20} parent=0 // pred_check
    _
  $region3: #{samba_forward.20} parent=0 // pred_check_branch
    %9 = sbr.rel (0) target = $region5
  $region4: #{samba_forward.20} parent=0 // pred_region
    _
  $region5: #{samba_forward.20} parent=0 // pred_fallthru
    _
  // Predicated region
  $region6: #{samba_forward.20} parent=0 // pred_check
    _
  $region7: #{samba_forward.20} parent=0 // pred_check_branch
    %11 = sbr.rel (0) target = $region9
  $region8: #{samba_forward.20} parent=0 // pred_region
    _
  $region9: #{samba_forward.20} parent=0 // pred_fallthru
    _
  // Predicated region
  $region10: #{samba_forward.20} parent=0 // pred_check
    _
  $region11: #{samba_forward.20} parent=0 // pred_check_branch
    %13 = sbr.rel (0) target = $region13
  $region12: #{samba_forward.20} parent=0 // pred_region
    _
  $region13: #{samba_forward.20} parent=0 // pred_fallthru
    _
  %v14 = vld [vmem:[%s0] sm:$0xff]
  %v15 = vld [vmem:[%s0 + $0x8] sm:$0xff]
  %vm16 = vcmask 261120
  %v17 = vsel %vm16, %v14, 0.0
  %18 = vadd.xlane.f32.xlu0 %v17
  %v19 = vpop.xlane.xlu0 %18
  %v20 = vsel %vm16, %v15, 0.0
  %21 = vadd.xlane.f32.xlu0 %v20
  %v22 = vpop.xlane.xlu0 %21
  %v23 = vrcp.pop 32.0
  %v24 = vmul.f32 32.0, %v23
  %v25 = vsub.f32 1.0, %v24
  %v26 = vmul.f32 %v23, %v25
  %v27 = vadd.f32 %v23, %v26
  %vm28 = vweird.f32 %v23
  %v29 = vsel %vm28, %v23, %v27
  %v30 = vmul.f32 %v19, %v29
  %v31 = vmul.f32 %v22, %v29
  %v32 = vsub.f32 %v14, %v30
  %v33 = vsub.f32 %v15, %v31
  %v34 = vmul.f32 %v32, %v32
  %v35 = vmul.f32 %v33, %v33
  %v36 = vsel %vm16, %v34, 0.0
  %37 = vadd.xlane.f32.xlu0 %v36
  %v38 = vpop.xlane.xlu0 %37
  %v39 = vsel %vm16, %v35, 0.0
  %40 = vadd.xlane.f32.xlu0 %v39
  %v41 = vpop.xlane.xlu0 %40
  %v42 = vmul.f32 %v38, %v29
  %v43 = vmul.f32 %v41, %v29
  %v44 = vadd.f32 %v42, 1e-05
  %v45 = vadd.f32 %v43, 1e-05
  %v46 = vrsqrt.pop %v44
  %v47 = vmul.f32 %v46, %v44
  %v48 = vmul.f32 %v47, %v46
  %v49 = vmul.f32 0.5, %v48
  %v50 = vsub.f32 1.5, %v49
  %v51 = vmul.f32 %v46, %v50
  %vm52 = vweird.f32 %v44
  %vm53 = vweird.f32 %v46
  %vm54 = vmor %vm52, %vm53
  %v55 = vsel %vm54, %v46, %v51
  %v56 = vrsqrt.pop %v45
  %v57 = vmul.f32 %v56, %v45
  %v58 = vmul.f32 %v57, %v56
  %v59 = vmul.f32 0.5, %v58
  %v60 = vsub.f32 1.5, %v59
  %v61 = vmul.f32 %v56, %v60
  %vm62 = vweird.f32 %v45
  %vm63 = vweird.f32 %v56
  %vm64 = vmor %vm62, %vm63
  %v65 = vsel %vm64, %v56, %v61
  %v66 = vmul.f32 %v32, %v55
  %v67 = vmul.f32 %v33, %v65
  %v68 = vld [vmem:[%s1] sm:$0x1]
  %v70 = vperm.slane %v68, 0
  %v72 = vmul.f32 %v66, %v70
  %v73 = vmul.f32 %v67, %v70
  %v74 = vld [vmem:[%s2] sm:$0x1]
  %v76 = vperm.slane %v74, 0
  %v78 = vadd.f32 %v72, %v76
  %v79 = vadd.f32 %v73, %v76
  %v80 = vpack.c.bf16 %v78, %v78
  %v81 = vpack.c.bf16 %v79, %v79
  %vm82 = vcmask 257024
  %83 = vst.msk [vmem:[%s3] sm:$0xf] %vm82, %v80
  %84 = vst.msk [vmem:[%s3 + $0x4] sm:$0xf] %vm82, %v81
  // Predicated region
  $region14: #{samba_forward.20} parent=0 // pred_check
    _
  $region15: #{samba_forward.20} parent=0 // pred_check_branch
    %86 = sbr.rel (0) target = $region17
  $region16: #{samba_forward.20} parent=0 // pred_region
    _
  $region17: #{samba_forward.20} parent=0 // pred_fallthru
    _
  // Predicated region
  $region18: #{samba_forward.20} parent=0 // pred_check
    _
  $region19: #{samba_forward.20} parent=0 // pred_check_branch
    %88 = sbr.rel (0) target = $region21
  $region20: #{samba_forward.20} parent=0 // pred_region
    _
  $region21: #{samba_forward.20} parent=0 // pred_fallthru
    _

// kernel: samba_forward.24
$region0: #{samba_forward.24}
  #allocation0 [shape = 'u32[]', space=smem, size = 0x4, offset = 0x4, fixed_abs, tag = 'smem constant byte address 0x4 - core index']
  #allocation1 [shape = 'u32[72,128]{1,0:T(1,128)}', space=vmem, size = 0x9000, scoped, tag = 'internal scratch']
  #allocation2 [shape = 'f32[8,64]{1,0:T(8,128)}', space=vmem, size = 0x1000, scoped, tag = 'scratch operand']
  %s0 = inlined_call_operand.vmem [shape: bf16[2,8,64], index: 0, kind: input, shape index: {}]
  %s1 = inlined_call_operand.vmem [shape: bf16[2,8,64], index: 1, kind: input, shape index: {}]
  %s2 = inlined_call_operand.vmem [shape: bf16[2,8,64], index: 2, kind: input, shape index: {}]
  %s3 = inlined_call_operand.vmem [shape: bf16[2,1,8,8], index: 3, kind: input, shape index: {}]
  %s4 = inlined_call_operand.vmem [shape: bf16[2,1,8,8], index: 4, kind: input, shape index: {}]
  %s5 = inlined_call_operand.vmem [shape: f32[8,64], index: 5, kind: input, shape index: {}]
  %s6 = inlined_call_operand.vmem [shape: f32[1,64], index: 6, kind: input, shape index: {}]
  %s7 = inlined_call_operand.vmem [shape: f32[1,64], index: 7, kind: input, shape index: {}]
  %s8 = inlined_call_operand.vmem [shape: bf16[2,8,64], index: 8, kind: output, shape index: {}]
  %s9 = sld [smem:[#allocation0]]
  $region69: #{samba_forward.24} parent=0
    _
  %s11 = ssub.s32 1, %s9
  %s12 = scalar_select 0, %s11, %s9
  loop: start=0, step=1, limit=4
  $region2: #{samba_forward.24} parent=0 // loop_pre_header
    _
  $region3: #{samba_forward.24} parent=0 // loop_header
    %s14 = sphi 0, %s18
    %p15 = scmp.ge.s32.totalorder %s14, 4
    %s21 = sphi 0, %s40
    %s22 = sphi 0, %s36
    %s23 = sphi 0, %s32
    %s24 = sphi 0, %s21
    %s25 = sphi 0, %s22
    %s26 = sphi 0, %s23
    %s27 = sphi 0, %s24
    %s28 = sphi 0, %s25
    %s29 = sphi 0, %s26
    %s47 = sphi 0, %s49
    %s50 = sphi 0, %s47
    %s51 = sphi 0, %s50
    %s67 = sphi 0, %s51
    %s77 = sphi 0, %s79
    %s80 = sphi 0, %s77
    %s81 = sphi 0, %s80
    %s97 = sphi 0, %s81
    %s107 = sphi 0, %s109
    %s110 = sphi 0, %s107
    %s111 = sphi 0, %s110
    %s127 = sphi 0, %s111
    %s135 = sphi 0, %s137
    %s138 = sphi 0, %s135
    %s139 = sphi 0, %s138
    %s155 = sphi 0, %s139
    %s163 = sphi 0, %s165
    %s166 = sphi 0, %s163
    %s167 = sphi 0, %s166
    %s183 = sphi 0, %s167
    %s189 = sphi 0, %s191
    %s192 = sphi 0, %s189
    %s193 = sphi 0, %s192
    %s209 = sphi 0, %s193
    %s215 = sphi 0, %s217
    %s218 = sphi 0, %s215
    %s219 = sphi 0, %s218
    %s235 = sphi 0, %s219
    %s241 = sphi 0, %s243
    %s244 = sphi 0, %s241
    %s245 = sphi 0, %s244
    %s261 = sphi 0, %s245
    %s271 = sphi 0, %s273
    %s274 = sphi 0, %s271
    %s275 = sphi 0, %s274
    %s291 = sphi 0, %s275
  $region4: #{samba_forward.24} parent=0 // loop_header_branch
    %17 = sbr.rel (%p15) target = $region8
  $region5: #{samba_forward.24} parent=0 // loop_body
    %s19 = ssub.s32 %s14, 1
    %s20 = ssub.s32 %s14, 2
    %s30 = sadd.s32 1, %s23
    %p31 = scmp.ge.s32.totalorder %s30, 1
    %s32 = scalar_select %p31, 0, %s30
    %s33 = sadd.s32 1, %s22
    %s34 = scalar_select %p31, %s33, %s22
    %p35 = scmp.ge.s32.totalorder %s34, 1
    %s36 = scalar_select %p35, 0, %s34
    %s37 = sadd.s32 1, %s21
    %s38 = scalar_select %p35, %s37, %s21
    %p39 = scmp.ge.s32.totalorder %s38, 2
    %s40 = scalar_select %p39, 0, %s38
    %s41 = ssub.s32 %s21, %s40
    %s42 = ssub.s32 %s23, %s32
    %s43 = sor.u32 %s41, %s42
    %s44 = ssub.s32 %s22, %s36
    %s45 = sor.u32 %s43, %s44
    %p46 = scmp.eq.s32.totalorder %s45, 0
    %s48 = sadd.s32 %s47, 1
    %s49 = scalar_select %p46, %s47, %s48
    %p52 = pneg %p46
    %p53 = scmp.eq.s32.totalorder %s14, 1
    %p54 = por %p52, %p53
    %p55 = scmp.ne.s32.totalorder %s47, %s50
    %p56 = scmp.eq.s32.totalorder %s14, 0
    %p57 = por %p55, %p56
    %p58 = scmp.ne.s32.totalorder %s47, %s50
    %p59 = scmp.eq.s32.totalorder %s19, 1
    %p60 = por %p58, %p59
    %p61 = scmp.ne.s32.totalorder %s50, %s51
    %p62 = scmp.eq.s32.totalorder %s19, 0
    %p63 = por %p61, %p62
    %p64 = scmp.ne.s32.totalorder %s50, %s51
    %p65 = scmp.eq.s32.totalorder %s20, 1
    %p66 = por %p64, %p65
    %p68 = scmp.ne.s32.totalorder %s51, %s67
    %p69 = scmp.eq.s32.totalorder %s20, 0
    %p70 = por %p68, %p69
    %s71 = ssub.s32 %s21, %s40
    %s72 = ssub.s32 %s23, %s32
    %s73 = sor.u32 %s71, %s72
    %s74 = ssub.s32 %s22, %s36
    %s75 = sor.u32 %s73, %s74
    %p76 = scmp.eq.s32.totalorder %s75, 0
    %s78 = sadd.s32 %s77, 1
    %s79 = scalar_select %p76, %s77, %s78
    %p82 = pneg %p76
    %p83 = scmp.eq.s32.totalorder %s14, 1
    %p84 = por %p82, %p83
    %p85 = scmp.ne.s32.totalorder %s77, %s80
    %p86 = scmp.eq.s32.totalorder %s14, 0
    %p87 = por %p85, %p86
    %p88 = scmp.ne.s32.totalorder %s77, %s80
    %p89 = scmp.eq.s32.totalorder %s19, 1
    %p90 = por %p88, %p89
    %p91 = scmp.ne.s32.totalorder %s80, %s81
    %p92 = scmp.eq.s32.totalorder %s19, 0
    %p93 = por %p91, %p92
    %p94 = scmp.ne.s32.totalorder %s80, %s81
    %p95 = scmp.eq.s32.totalorder %s20, 1
    %p96 = por %p94, %p95
    %p98 = scmp.ne.s32.totalorder %s81, %s97
    %p99 = scmp.eq.s32.totalorder %s20, 0
    %p100 = por %p98, %p99
    %s101 = ssub.s32 %s21, %s40
    %s102 = ssub.s32 %s23, %s32
    %s103 = sor.u32 %s101, %s102
    %s104 = ssub.s32 %s22, %s36
    %s105 = sor.u32 %s103, %s104
    %p106 = scmp.eq.s32.totalorder %s105, 0
    %s108 = sadd.s32 %s107, 1
    %s109 = scalar_select %p106, %s107, %s108
    %p112 = pneg %p106
    %p113 = scmp.eq.s32.totalorder %s14, 1
    %p114 = por %p112, %p113
    %p115 = scmp.ne.s32.totalorder %s107, %s110
    %p116 = scmp.eq.s32.totalorder %s14, 0
    %p117 = por %p115, %p116
    %p118 = scmp.ne.s32.totalorder %s107, %s110
    %p119 = scmp.eq.s32.totalorder %s19, 1
    %p120 = por %p118, %p119
    %p121 = scmp.ne.s32.totalorder %s110, %s111
    %p122 = scmp.eq.s32.totalorder %s19, 0
    %p123 = por %p121, %p122
    %p124 = scmp.ne.s32.totalorder %s110, %s111
    %p125 = scmp.eq.s32.totalorder %s20, 1
    %p126 = por %p124, %p125
    %p128 = scmp.ne.s32.totalorder %s111, %s127
    %p129 = scmp.eq.s32.totalorder %s20, 0
    %p130 = por %p128, %p129
    %s131 = ssub.s32 %s21, %s40
    %s132 = ssub.s32 %s23, %s32
    %s133 = sor.u32 %s131, %s132
    %p134 = scmp.eq.s32.totalorder %s133, 0
    %s136 = sadd.s32 %s135, 1
    %s137 = scalar_select %p134, %s135, %s136
    %p140 = pneg %p134
    %p141 = scmp.eq.s32.totalorder %s14, 1
    %p142 = por %p140, %p141
    %p143 = scmp.ne.s32.totalorder %s135, %s138
    %p144 = scmp.eq.s32.totalorder %s14, 0
    %p145 = por %p143, %p144
    %p146 = scmp.ne.s32.totalorder %s135, %s138
    %p147 = scmp.eq.s32.totalorder %s19, 1
    %p148 = por %p146, %p147
    %p149 = scmp.ne.s32.totalorder %s138, %s139
    %p150 = scmp.eq.s32.totalorder %s19, 0
    %p151 = por %p149, %p150
    %p152 = scmp.ne.s32.totalorder %s138, %s139
    %p153 = scmp.eq.s32.totalorder %s20, 1
    %p154 = por %p152, %p153
    %p156 = scmp.ne.s32.totalorder %s139, %s155
    %p157 = scmp.eq.s32.totalorder %s20, 0
    %p158 = por %p156, %p157
    %s159 = ssub.s32 %s21, %s40
    %s160 = ssub.s32 %s23, %s32
    %s161 = sor.u32 %s159, %s160
    %p162 = scmp.eq.s32.totalorder %s161, 0
    %s164 = sadd.s32 %s163, 1
    %s165 = scalar_select %p162, %s163, %s164
    %p168 = pneg %p162
    %p169 = scmp.eq.s32.totalorder %s14, 1
    %p170 = por %p168, %p169
    %p171 = scmp.ne.s32.totalorder %s163, %s166
    %p172 = scmp.eq.s32.totalorder %s14, 0
    %p173 = por %p171, %p172
    %p174 = scmp.ne.s32.totalorder %s163, %s166
    %p175 = scmp.eq.s32.totalorder %s19, 1
    %p176 = por %p174, %p175
    %p177 = scmp.ne.s32.totalorder %s166, %s167
    %p178 = scmp.eq.s32.totalorder %s19, 0
    %p179 = por %p177, %p178
    %p180 = scmp.ne.s32.totalorder %s166, %s167
    %p181 = scmp.eq.s32.totalorder %s20, 1
    %p182 = por %p180, %p181
    %p184 = scmp.ne.s32.totalorder %s167, %s183
    %p185 = scmp.eq.s32.totalorder %s20, 0
    %p186 = por %p184, %p185
    %s187 = ssub.s32 %s22, %s36
    %p188 = scmp.eq.s32.totalorder %s187, 0
    %s190 = sadd.s32 %s189, 1
    %s191 = scalar_select %p188, %s189, %s190
    %p194 = pneg %p188
    %p195 = scmp.eq.s32.totalorder %s14, 1
    %p196 = por %p194, %p195
    %p197 = scmp.ne.s32.totalorder %s189, %s192
    %p198 = scmp.eq.s32.totalorder %s14, 0
    %p199 = por %p197, %p198
    %p200 = scmp.ne.s32.totalorder %s189, %s192
    %p201 = scmp.eq.s32.totalorder %s19, 1
    %p202 = por %p200, %p201
    %p203 = scmp.ne.s32.totalorder %s192, %s193
    %p204 = scmp.eq.s32.totalorder %s19, 0
    %p205 = por %p203, %p204
    %p206 = scmp.ne.s32.totalorder %s192, %s193
    %p207 = scmp.eq.s32.totalorder %s20, 1
    %p208 = por %p206, %p207
    %p210 = scmp.ne.s32.totalorder %s193, %s209
    %p211 = scmp.eq.s32.totalorder %s20, 0
    %p212 = por %p210, %p211
    %s213 = ssub.s32 %s22, %s36
    %p214 = scmp.eq.s32.totalorder %s213, 0
    %s216 = sadd.s32 %s215, 1
    %s217 = scalar_select %p214, %s215, %s216
    %p220 = pneg %p214
    %p221 = scmp.eq.s32.totalorder %s14, 1
    %p222 = por %p220, %p221
    %p223 = scmp.ne.s32.totalorder %s215, %s218
    %p224 = scmp.eq.s32.totalorder %s14, 0
    %p225 = por %p223, %p224
    %p226 = scmp.ne.s32.totalorder %s215, %s218
    %p227 = scmp.eq.s32.totalorder %s19, 1
    %p228 = por %p226, %p227
    %p229 = scmp.ne.s32.totalorder %s218, %s219
    %p230 = scmp.eq.s32.totalorder %s19, 0
    %p231 = por %p229, %p230
    %p232 = scmp.ne.s32.totalorder %s218, %s219
    %p233 = scmp.eq.s32.totalorder %s20, 1
    %p234 = por %p232, %p233
    %p236 = scmp.ne.s32.totalorder %s219, %s235
    %p237 = scmp.eq.s32.totalorder %s20, 0
    %p238 = por %p236, %p237
    %s239 = ssub.s32 %s22, %s36
    %p240 = scmp.eq.s32.totalorder %s239, 0
    %s242 = sadd.s32 %s241, 1
    %s243 = scalar_select %p240, %s241, %s242
    %p246 = pneg %p240
    %p247 = scmp.eq.s32.totalorder %s14, 1
    %p248 = por %p246, %p247
    %p249 = scmp.ne.s32.totalorder %s241, %s244
    %p250 = scmp.eq.s32.totalorder %s14, 0
    %p251 = por %p249, %p250
    %p252 = scmp.ne.s32.totalorder %s241, %s244
    %p253 = scmp.eq.s32.totalorder %s19, 1
    %p254 = por %p252, %p253
    %p255 = scmp.ne.s32.totalorder %s244, %s245
    %p256 = scmp.eq.s32.totalorder %s19, 0
    %p257 = por %p255, %p256
    %p258 = scmp.ne.s32.totalorder %s244, %s245
    %p259 = scmp.eq.s32.totalorder %s20, 1
    %p260 = por %p258, %p259
    %p262 = scmp.ne.s32.totalorder %s245, %s261
    %p263 = scmp.eq.s32.totalorder %s20, 0
    %p264 = por %p262, %p263
    %s265 = ssub.s32 %s21, %s40
    %s266 = ssub.s32 %s23, %s32
    %s267 = sor.u32 %s265, %s266
    %s268 = ssub.s32 %s22, %s36
    %s269 = sor.u32 %s267, %s268
    %p270 = scmp.eq.s32.totalorder %s269, 0
    %s272 = sadd.s32 %s271, 1
    %s273 = scalar_select %p270, %s271, %s272
    %p276 = pneg %p270
    %p277 = scmp.eq.s32.totalorder %s14, 1
    %p278 = por %p276, %p277
    %p279 = scmp.ne.s32.totalorder %s271, %s274
    %p280 = scmp.eq.s32.totalorder %s14, 0
    %p281 = por %p279, %p280
    %p282 = scmp.ne.s32.totalorder %s271, %s274
    %p283 = scmp.eq.s32.totalorder %s19, 1
    %p284 = por %p282, %p283
    %p285 = scmp.ne.s32.totalorder %s274, %s275
    %p286 = scmp.eq.s32.totalorder %s19, 0
    %p287 = por %p285, %p286
    %p288 = scmp.ne.s32.totalorder %s274, %s275
    %p289 = scmp.eq.s32.totalorder %s20, 1
    %p290 = por %p288, %p289
    %p292 = scmp.ne.s32.totalorder %s275, %s291
    %p293 = scmp.eq.s32.totalorder %s20, 0
    %p294 = por %p292, %p293
    %p295 = scmp.le.s32.totalorder 1, %s14
    %p296 = scmp.lt.s32.totalorder %s14, 3
    %p297 = pnand %p295, %p296
    %p298 = pneg %p297
    // Predicated region
    $region9: #{samba_forward.24} parent=5 // pred_check
      _
    $region10: #{samba_forward.24} parent=5 // pred_check_branch
      %300 = sbr.rel (%p297) target = $region12
    $region11: #{samba_forward.24} parent=5 // pred_region
      %s301 = ssub.s32 %s14, 1
      // Predicated region
      $region13: #{samba_forward.24} parent=11 // pred_check
        %p302 = pneg %p205
      $region14: #{samba_forward.24} parent=11 // pred_check_branch
        %304 = sbr.rel (%p302) target = $region16
      $region15: #{samba_forward.24} parent=11 // pred_region
        %p305 = scmp.lt.s32.totalorder %s25, 0
        %s306 = scalar_select %p305, %s25, 0
        %s307 = smul.addr %s306, 8
        %s308 = scalar_lea.vmem %s5, %s307
      $region16: #{samba_forward.24} parent=11 // pred_fallthru
        _
      // Predicated region
      $region17: #{samba_forward.24} parent=11 // pred_check
        %p309 = pneg %p231
      $region18: #{samba_forward.24} parent=11 // pred_check_branch
        %311 = sbr.rel (%p309) target = $region20
      $region19: #{samba_forward.24} parent=11 // pred_region
        %p312 = scmp.lt.s32.totalorder %s25, 0
        %s313 = scalar_select %p312, %s25, 0
        %s314 = scalar_lea.vmem %s6, %s313
      $region20: #{samba_forward.24} parent=11 // pred_fallthru
        _
      // Predicated region
      $region21: #{samba_forward.24} parent=11 // pred_check
        %p315 = pneg %p257
      $region22: #{samba_forward.24} parent=11 // pred_check_branch
        %317 = sbr.rel (%p315) target = $region24
      $region23: #{samba_forward.24} parent=11 // pred_region
        %p318 = scmp.lt.s32.totalorder %s25, 0
        %s319 = scalar_select %p318, %s25, 0
        %s320 = scalar_lea.vmem %s7, %s319
      $region24: #{samba_forward.24} parent=11 // pred_fallthru
        _
    $region12: #{samba_forward.24} parent=5 // pred_fallthru
      _
    %p321 = scmp.lt.s32.totalorder %s14, 2
    // Predicated region
    $region25: #{samba_forward.24} parent=5 // pred_check
      %p322 = pneg %p321
    $region26: #{samba_forward.24} parent=5 // pred_check_branch
      %324 = sbr.rel (%p322) target = $region28
    $region27: #{samba_forward.24} parent=5 // pred_region
      // Predicated region
      $region29: #{samba_forward.24} parent=27 // pred_check
        %p325 = pneg %p57
      $region30: #{samba_forward.24} parent=27 // pred_check_branch
        %327 = sbr.rel (%p325) target = $region32
      $region31: #{samba_forward.24} parent=27 // pred_region
        %p328 = scmp.lt.s32.totalorder %s21, 1
        %s329 = scalar_select %p328, %s21, 1
        %p330 = scmp.lt.s32.totalorder %s23, 0
        %s331 = scalar_select %p330, %s23, 0
        %p332 = scmp.lt.s32.totalorder %s22, 0
        %s333 = scalar_select %p332, %s22, 0
        %s334 = sadd.s32 %s333, %s331
        %s335 = sadd.s32 %s334, %s329
        %s336 = smul.addr %s335, 4
        %s337 = scalar_lea.vmem %s0, %s336
      $region32: #{samba_forward.24} parent=27 // pred_fallthru
        _
      // Predicated region
      $region33: #{samba_forward.24} parent=27 // pred_check
        %p338 = pneg %p87
      $region34: #{samba_forward.24} parent=27 // pred_check_branch
        %340 = sbr.rel (%p338) target = $region36
      $region35: #{samba_forward.24} parent=27 // pred_region
        %p341 = scmp.lt.s32.totalorder %s21, 1
        %s342 = scalar_select %p341, %s21, 1
        %p343 = scmp.lt.s32.totalorder %s23, 0
        %s344 = scalar_select %p343, %s23, 0
        %p345 = scmp.lt.s32.totalorder %s22, 0
        %s346 = scalar_select %p345, %s22, 0
        %s347 = sadd.s32 %s346, %s344
        %s348 = sadd.s32 %s347, %s342
        %s349 = smul.addr %s348, 4
        %s350 = scalar_lea.vmem %s1, %s349
      $region36: #{samba_forward.24} parent=27 // pred_fallthru
        _
      // Predicated region
      $region37: #{samba_forward.24} parent=27 // pred_check
        %p351 = pneg %p117
      $region38: #{samba_forward.24} parent=27 // pred_check_branch
        %353 = sbr.rel (%p351) target = $region40
      $region39: #{samba_forward.24} parent=27 // pred_region
        %p354 = scmp.lt.s32.totalorder %s21, 1
        %s355 = scalar_select %p354, %s21, 1
        %p356 = scmp.lt.s32.totalorder %s23, 0
        %s357 = scalar_select %p356, %s23, 0
        %p358 = scmp.lt.s32.totalorder %s22, 0
        %s359 = scalar_select %p358, %s22, 0
        %s360 = sadd.s32 %s359, %s357
        %s361 = sadd.s32 %s360, %s355
        %s362 = smul.addr %s361, 4
        %s363 = scalar_lea.vmem %s2, %s362
      $region40: #{samba_forward.24} parent=27 // pred_fallthru
        _
      // Predicated region
      $region41: #{samba_forward.24} parent=27 // pred_check
        %p364 = pneg %p145
      $region42: #{samba_forward.24} parent=27 // pred_check_branch
        %366 = sbr.rel (%p364) target = $region44
      $region43: #{samba_forward.24} parent=27 // pred_region
        %p367 = scmp.lt.s32.totalorder %s21, 1
        %s368 = scalar_select %p367, %s21, 1
        %p369 = scmp.lt.s32.totalorder %s23, 0
        %s370 = scalar_select %p369, %s23, 0
        %s371 = sadd.s32 %s370, %s368
        %s372 = smul.addr %s371, 4
        %s373 = scalar_lea.vmem %s3, %s372
      $region44: #{samba_forward.24} parent=27 // pred_fallthru
        _
      // Predicated region
      $region45: #{samba_forward.24} parent=27 // pred_check
        %p374 = pneg %p173
      $region46: #{samba_forward.24} parent=27 // pred_check_branch
        %376 = sbr.rel (%p374) target = $region48
      $region47: #{samba_forward.24} parent=27 // pred_region
        %p377 = scmp.lt.s32.totalorder %s21, 1
        %s378 = scalar_select %p377, %s21, 1
        %p379 = scmp.lt.s32.totalorder %s23, 0
        %s380 = scalar_select %p379, %s23, 0
        %s381 = sadd.s32 %s380, %s378
        %s382 = smul.addr %s381, 4
        %s383 = scalar_lea.vmem %s4, %s382
      $region48: #{samba_forward.24} parent=27 // pred_fallthru
        _
    $region28: #{samba_forward.24} parent=5 // pred_fallthru
      _
    %p384 = scmp.le.s32.totalorder 1, %s14
    %p385 = scmp.lt.s32.totalorder %s14, 3
    %p386 = pnand %p384, %p385
    %p387 = pneg %p386
    // Predicated region
    $region49: #{samba_forward.24} parent=5 // pred_check
      _
    $region50: #{samba_forward.24} parent=5 // pred_check_branch
      %389 = sbr.rel (%p386) target = $region52
    $region51: #{samba_forward.24} parent=5 // pred_region
      %s390 = ssub.s32 %s14, 1
      %p391 = scmp.lt.s32.totalorder %s24, 1
      %s392 = scalar_select %p391, %s24, 1
      %p393 = scmp.lt.s32.totalorder %s26, 0
      %s394 = scalar_select %p393, %s26, 0
      %p395 = scmp.lt.s32.totalorder %s25, 0
      %s396 = scalar_select %p395, %s25, 0
      %s397 = sadd.s32 %s396, %s394
      %s398 = sadd.s32 %s397, %s392
      %s399 = smul.addr %s398, 4
      %s400 = scalar_lea.vmem %s0, %s399
      %p401 = pneg %p63
      %p402 = pneg %p60
      %p403 = scmp.lt.s32.totalorder %s24, 1
      %s404 = scalar_select %p403, %s24, 1
      %p405 = scmp.lt.s32.totalorder %s26, 0
      %s406 = scalar_select %p405, %s26, 0
      %p407 = scmp.lt.s32.totalorder %s25, 0
      %s408 = scalar_select %p407, %s25, 0
      %s409 = sadd.s32 %s408, %s406
      %s410 = sadd.s32 %s409, %s404
      %s411 = smul.addr %s410, 4
      %s412 = scalar_lea.vmem %s1, %s411
      %p413 = pneg %p93
      %p414 = pneg %p90
      %p415 = scmp.lt.s32.totalorder %s24, 1
      %s416 = scalar_select %p415, %s24, 1
      %p417 = scmp.lt.s32.totalorder %s26, 0
      %s418 = scalar_select %p417, %s26, 0
      %p419 = scmp.lt.s32.totalorder %s25, 0
      %s420 = scalar_select %p419, %s25, 0
      %s421 = sadd.s32 %s420, %s418
      %s422 = sadd.s32 %s421, %s416
      %s423 = smul.addr %s422, 4
      %s424 = scalar_lea.vmem %s2, %s423
      %p425 = pneg %p123
      %p426 = pneg %p120
      %p427 = scmp.lt.s32.totalorder %s24, 1
      %s428 = scalar_select %p427, %s24, 1
      %p429 = scmp.lt.s32.totalorder %s26, 0
      %s430 = scalar_select %p429, %s26, 0
      %s431 = sadd.s32 %s430, %s428
      %s432 = smul.addr %s431, 4
      %s433 = scalar_lea.vmem %s3, %s432
      %p434 = pneg %p151
      %p435 = pneg %p148
      %p436 = scmp.lt.s32.totalorder %s24, 1
      %s437 = scalar_select %p436, %s24, 1
      %p438 = scmp.lt.s32.totalorder %s26, 0
      %s439 = scalar_select %p438, %s26, 0
      %s440 = sadd.s32 %s439, %s437
      %s441 = smul.addr %s440, 4
      %s442 = scalar_lea.vmem %s4, %s441
      %p443 = pneg %p179
      %p444 = pneg %p176
      %p445 = scmp.lt.s32.totalorder %s25, 0
      %s446 = scalar_select %p445, %s25, 0
      %s447 = smul.addr %s446, 8
      %s448 = scalar_lea.vmem %s5, %s447
      %p449 = pneg %p205
      %p450 = pneg %p202
      %p451 = scmp.lt.s32.totalorder %s25, 0
      %s452 = scalar_select %p451, %s25, 0
      %s453 = scalar_lea.vmem %s6, %s452
      %p454 = pneg %p231
      %p455 = pneg %p228
      %p456 = scmp.lt.s32.totalorder %s25, 0
      %s457 = scalar_select %p456, %s25, 0
      %s458 = scalar_lea.vmem %s7, %s457
      %p459 = pneg %p257
      %p460 = pneg %p254
      %p461 = pneg %p287
      %p462 = pneg %p284
      %p463 = scmp.lt.s32.totalorder %s24, 1
      %s464 = scalar_select %p463, %s24, 1
      %p465 = scmp.lt.s32.totalorder %s26, 0
      %s466 = scalar_select %p465, %s26, 0
      %p467 = scmp.lt.s32.totalorder %s25, 0
      %s468 = scalar_select %p467, %s25, 0
      %s469 = sadd.s32 %s468, %s466
      %s470 = sadd.s32 %s469, %s464
      %s471 = smul.addr %s470, 4
      %s472 = scalar_lea.vmem %s8, %s471
      %p473 = scmp.lt.s32.totalorder %s24, 1
      %s474 = scalar_select %p473, %s24, 1
      %p475 = scmp.lt.s32.totalorder %s26, 0
      %s476 = scalar_select %p475, %s26, 0
      %p477 = scmp.lt.s32.totalorder %s25, 0
      %s478 = scalar_select %p477, %s25, 0
      %s479 = sadd.s32 %s478, %s476
      %s480 = sadd.s32 %s479, %s474
      %s481 = smul.addr %s480, 4
      %s482 = scalar_lea.vmem %s0, %s481
      %p483 = scmp.lt.s32.totalorder %s24, 1
      %s484 = scalar_select %p483, %s24, 1
      %p485 = scmp.lt.s32.totalorder %s26, 0
      %s486 = scalar_select %p485, %s26, 0
      %p487 = scmp.lt.s32.totalorder %s25, 0
      %s488 = scalar_select %p487, %s25, 0
      %s489 = sadd.s32 %s488, %s486
      %s490 = sadd.s32 %s489, %s484
      %s491 = smul.addr %s490, 4
      %s492 = scalar_lea.vmem %s1, %s491
      %p493 = scmp.lt.s32.totalorder %s24, 1
      %s494 = scalar_select %p493, %s24, 1
      %p495 = scmp.lt.s32.totalorder %s26, 0
      %s496 = scalar_select %p495, %s26, 0
      %p497 = scmp.lt.s32.totalorder %s25, 0
      %s498 = scalar_select %p497, %s25, 0
      %s499 = sadd.s32 %s498, %s496
      %s500 = sadd.s32 %s499, %s494
      %s501 = smul.addr %s500, 4
      %s502 = scalar_lea.vmem %s2, %s501
      %p503 = scmp.lt.s32.totalorder %s24, 1
      %s504 = scalar_select %p503, %s24, 1
      %p505 = scmp.lt.s32.totalorder %s26, 0
      %s506 = scalar_select %p505, %s26, 0
      %s507 = sadd.s32 %s506, %s504
      %s508 = smul.addr %s507, 4
      %s509 = scalar_lea.vmem %s3, %s508
      %p510 = scmp.lt.s32.totalorder %s24, 1
      %s511 = scalar_select %p510, %s24, 1
      %p512 = scmp.lt.s32.totalorder %s26, 0
      %s513 = scalar_select %p512, %s26, 0
      %s514 = sadd.s32 %s513, %s511
      %s515 = smul.addr %s514, 4
      %s516 = scalar_lea.vmem %s4, %s515
      %p517 = scmp.lt.s32.totalorder %s25, 0
      %s518 = scalar_select %p517, %s25, 0
      %s519 = smul.addr %s518, 8
      %s520 = scalar_lea.vmem %s5, %s519
      %p521 = scmp.lt.s32.totalorder %s25, 0
      %s522 = scalar_select %p521, %s25, 0
      %s523 = scalar_lea.vmem %s6, %s522
      %p524 = scmp.lt.s32.totalorder %s25, 0
      %s525 = scalar_select %p524, %s25, 0
      %s526 = scalar_lea.vmem %s7, %s525
      %p527 = scmp.lt.s32.totalorder %s24, 1
      %s528 = scalar_select %p527, %s24, 1
      %p529 = scmp.lt.s32.totalorder %s26, 0
      %s530 = scalar_select %p529, %s26, 0
      %p531 = scmp.lt.s32.totalorder %s25, 0
      %s532 = scalar_select %p531, %s25, 0
      %s533 = sadd.s32 %s532, %s530
      %s534 = sadd.s32 %s533, %s528
      %s535 = smul.addr %s534, 4
      %s536 = scalar_lea.vmem %s8, %s535
      %p537 = scmp.eq.s32.totalorder %s26, 0
      // Predicated region
      $region53: #{samba_forward.24} parent=51 // pred_check
        %p538 = pneg %p537
      $region54: #{samba_forward.24} parent=51 // pred_check_branch
        %540 = sbr.rel (%p538) target = $region56
      $region55: #{samba_forward.24} parent=51 // pred_region
        %vm541 = vcmask 523264
        %542 = vst.msk [vmem:[#allocation2] sm:$0xff] %vm541, 0.0
      $region56: #{samba_forward.24} parent=51 // pred_fallthru
        _
      %v543 = vld [vmem:[%s520] sm:$0xff]
      %v544 = vld [vmem:[%s523] sm:$0x1]
      %v545 = vld [vmem:[%s526] sm:$0x1]
      %v546 = vld [vmem:[#allocation2] sm:$0xff]
      %v547 = vld [vmem:[%s482] sm:$0xf]
      %v548 = vunpack.c.l.bf16 %v547
      %v549 = vld [vmem:[%s492] sm:$0xf]
      %v550 = vunpack.c.l.bf16 %v549
      %v552 = vperm.slane %v545, 0
      %v554 = vadd.f32 %v550, %v552
      %v555 = vmax.f32 %v554, 0.0
      %v556 = vand.u32 2147483647, %v554
      %v557 = vsub.f32 0.0, %v556
      %v558 = vmul.f32 %v557, 1.442695
      %v559 = vpow.pop %v558
      %v560 = vadd.f32 %v559, 1.0
      %v561 = vlog2.pop %v560
      %v562 = vmul.f32 %v561, 0.6931472
      %v563 = vadd.f32 %v555, %v562
      %vm564 = vcmp.gt.f32.partialorder %v554, 20.0
      %v565 = vsel %vm564, %v554, %v563
      %v566 = vmul.f32 %v565, %v548
      %v568 = vperm.slane %v544, 0
      %v570 = vmul.f32 %v568, %v548
      %v571 = vld [vmem:[%s502] sm:$0xf]
      %v572 = vunpack.c.l.bf16 %v571
      %v573 = vand.u32 2147483647, %v572
      %v574 = vsub.f32 0.0, %v573
      %v575 = vmul.f32 %v574, 1.442695
      %v576 = vpow.pop %v575
      %v577 = vadd.f32 %v576, 1.0
      %v578 = vrcp.pop %v577
      %vm579 = vcmp.ge.f32.partialorder %v572, 0.0
      %v580 = vmul.f32 %v576, %v578
      %v581 = vsel %vm579, %v578, %v580
      %v582 = vmul.f32 %v572, %v581
      %v583 = vld [vmem:[%s509] sm:$0xf]
      %v584 = vunpack.c.l.bf16 %v583
      %v585 = vld [vmem:[%s516] sm:$0xf]
      %v586 = vunpack.c.l.bf16 %v585
      %v588 = vrot.slane %v565, 1
      %v589 = vrot.slane %v565, 2
      %v590 = vrot.slane %v565, 3
      %v591 = vrot.slane %v565, 4
      %v592 = vrot.slane %v565, 5
      %v593 = vrot.slane %v565, 6
      %v594 = vrot.slane %v565, 7
      %v595 = vperm.slane %v565, 0
      %v596 = vperm.slane %v588, 0
      %v597 = vperm.slane %v589, 0
      %v598 = vperm.slane %v590, 0
      %v599 = vperm.slane %v591, 0
      %v600 = vperm.slane %v592, 0
      %v601 = vperm.slane %v593, 0
      %v602 = vperm.slane %v594, 0
      %v611 = vmul.f32 %v543, %v595
      %v612 = vmul.f32 %v543, %v596
      %v613 = vmul.f32 %v543, %v597
      %v614 = vmul.f32 %v543, %v598
      %v615 = vmul.f32 %v543, %v599
      %v616 = vmul.f32 %v543, %v600
      %v617 = vmul.f32 %v543, %v601
      %v618 = vmul.f32 %v543, %v602
      %v619 = vmul.f32 %v611, 1.442695
      %v620 = vpow.pop %v619
      %v621 = vmul.f32 %v612, 1.442695
      %v622 = vpow.pop %v621
      %v623 = vmul.f32 %v613, 1.442695
      %v624 = vpow.pop %v623
      %v625 = vmul.f32 %v614, 1.442695
      %v626 = vpow.pop %v625
      %v627 = vmul.f32 %v615, 1.442695
      %v628 = vpow.pop %v627
      %v629 = vmul.f32 %v616, 1.442695
      %v630 = vpow.pop %v629
      %v631 = vmul.f32 %v617, 1.442695
      %v632 = vpow.pop %v631
      %v633 = vmul.f32 %v618, 1.442695
      %v634 = vpow.pop %v633
      %v635 = vperm.slane %v584, 0
      %v636 = vlaneseq
      %v637 = vshrl.u32 %v636, 7
      %639 = vset.pattern.permute.xlu0 %v637
      %640 = vperm.xlu0 %639, %v635
      %v641 = vpop.permute.xlu0 %640
      %v642 = vperm.slane %v584, 1
      %v643 = vlaneseq
      %v644 = vshrl.u32 %v643, 7
      %646 = vset.pattern.permute.xlu0 %v644
      %647 = vperm.xlu0 %646, %v642
      %v648 = vpop.permute.xlu0 %647
      %v649 = vperm.slane %v584, 2
      %v650 = vlaneseq
      %v651 = vshrl.u32 %v650, 7
      %653 = vset.pattern.permute.xlu0 %v651
      %654 = vperm.xlu0 %653, %v649
      %v655 = vpop.permute.xlu0 %654
      %v656 = vperm.slane %v584, 3
      %v657 = vlaneseq
      %v658 = vshrl.u32 %v657, 7
      %660 = vset.pattern.permute.xlu0 %v658
      %661 = vperm.xlu0 %660, %v656
      %v662 = vpop.permute.xlu0 %661
      %v663 = vperm.slane %v584, 4
      %v664 = vlaneseq
      %v665 = vshrl.u32 %v664, 7
      %667 = vset.pattern.permute.xlu0 %v665
      %668 = vperm.xlu0 %667, %v663
      %v669 = vpop.permute.xlu0 %668
      %v670 = vperm.slane %v584, 5
      %v671 = vlaneseq
      %v672 = vshrl.u32 %v671, 7
      %674 = vset.pattern.permute.xlu0 %v672
      %675 = vperm.xlu0 %674, %v670
      %v676 = vpop.permute.xlu0 %675
      %v677 = vperm.slane %v584, 6
      %v678 = vlaneseq
      %v679 = vshrl.u32 %v678, 7
      %681 = vset.pattern.permute.xlu0 %v679
      %682 = vperm.xlu0 %681, %v677
      %v683 = vpop.permute.xlu0 %682
      %v684 = vperm.slane %v584, 7
      %v685 = vlaneseq
      %v686 = vshrl.u32 %v685, 7
      %688 = vset.pattern.permute.xlu0 %v686
      %689 = vperm.xlu0 %688, %v684
      %v690 = vpop.permute.xlu0 %689
      %v692 = vrot.slane %v566, 1
      %v693 = vrot.slane %v566, 2
      %v694 = vrot.slane %v566, 3
      %v695 = vrot.slane %v566, 4
      %v696 = vrot.slane %v566, 5
      %v697 = vrot.slane %v566, 6
      %v698 = vrot.slane %v566, 7
      %v699 = vperm.slane %v566, 0
      %v700 = vperm.slane %v692, 0
      %v701 = vperm.slane %v693, 0
      %v702 = vperm.slane %v694, 0
      %v703 = vperm.slane %v695, 0
      %v704 = vperm.slane %v696, 0
      %v705 = vperm.slane %v697, 0
      %v706 = vperm.slane %v698, 0
      %v715 = vmul.f32 %v641, %v699
      %v716 = vmul.f32 %v648, %v700
      %v717 = vmul.f32 %v655, %v701
      %v718 = vmul.f32 %v662, %v702
      %v719 = vmul.f32 %v669, %v703
      %v720 = vmul.f32 %v676, %v704
      %v721 = vmul.f32 %v683, %v705
      %v722 = vmul.f32 %v690, %v706
      %v723 = vperm.slane %v586, 0
      %v724 = vlaneseq
      %v725 = vshrl.u32 %v724, 7
      %727 = vset.pattern.permute.xlu0 %v725
      %728 = vperm.xlu0 %727, %v723
      %v729 = vpop.permute.xlu0 %728
      %v730 = vperm.slane %v586, 1
      %v731 = vlaneseq
      %v732 = vshrl.u32 %v731, 7
      %734 = vset.pattern.permute.xlu0 %v732
      %735 = vperm.xlu0 %734, %v730
      %v736 = vpop.permute.xlu0 %735
      %v737 = vperm.slane %v586, 2
      %v738 = vlaneseq
      %v739 = vshrl.u32 %v738, 7
      %741 = vset.pattern.permute.xlu0 %v739
      %742 = vperm.xlu0 %741, %v737
      %v743 = vpop.permute.xlu0 %742
      %v744 = vperm.slane %v586, 3
      %v745 = vlaneseq
      %v746 = vshrl.u32 %v745, 7
      %748 = vset.pattern.permute.xlu0 %v746
      %749 = vperm.xlu0 %748, %v744
      %v750 = vpop.permute.xlu0 %749
      %v751 = vperm.slane %v586, 4
      %v752 = vlaneseq
      %v753 = vshrl.u32 %v752, 7
      %755 = vset.pattern.permute.xlu0 %v753
      %756 = vperm.xlu0 %755, %v751
      %v757 = vpop.permute.xlu0 %756
      %v758 = vperm.slane %v586, 5
      %v759 = vlaneseq
      %v760 = vshrl.u32 %v759, 7
      %762 = vset.pattern.permute.xlu0 %v760
      %763 = vperm.xlu0 %762, %v758
      %v764 = vpop.permute.xlu0 %763
      %v765 = vperm.slane %v586, 6
      %v766 = vlaneseq
      %v767 = vshrl.u32 %v766, 7
      %769 = vset.pattern.permute.xlu0 %v767
      %770 = vperm.xlu0 %769, %v765
      %v771 = vpop.permute.xlu0 %770
      %v772 = vperm.slane %v586, 7
      %v773 = vlaneseq
      %v774 = vshrl.u32 %v773, 7
      %776 = vset.pattern.permute.xlu0 %v774
      %777 = vperm.xlu0 %776, %v772
      %v778 = vpop.permute.xlu0 %777
      %v779 = vmul.f32 %v620, %v546
      %v780 = vadd.f32 %v779, %v715
      %v781 = vmul.f32 %v729, %v780
      %vm782 = vcmask 523264
      %v783 = vsel %vm782, %v781, 0.0
      %v784 = vrot.slane %v783, 4
      %v785 = vadd.f32 %v783, %v784
      %v786 = vrot.slane %v785, 2
      %v787 = vadd.f32 %v785, %v786
      %v788 = vrot.slane %v787, 1
      %v789 = vadd.f32 %v787, %v788
      %v790 = vmul.f32 %v622, %v780
      %v791 = vadd.f32 %v790, %v716
      %v792 = vmul.f32 %v736, %v791
      %v793 = vsel %vm782, %v792, 0.0
      %v794 = vrot.slane %v793, 4
      %v795 = vadd.f32 %v793, %v794
      %v796 = vrot.slane %v795, 2
      %v797 = vadd.f32 %v795, %v796
      %v798 = vrot.slane %v797, 1
      %v799 = vadd.f32 %v797, %v798
      %v800 = vmul.f32 %v624, %v791
      %v801 = vadd.f32 %v800, %v717
      %v802 = vmul.f32 %v743, %v801
      %v803 = vsel %vm782, %v802, 0.0
      %v804 = vrot.slane %v803, 4
      %v805 = vadd.f32 %v803, %v804
      %v806 = vrot.slane %v805, 2
      %v807 = vadd.f32 %v805, %v806
      %v808 = vrot.slane %v807, 1
      %v809 = vadd.f32 %v807, %v808
      %v810 = vmul.f32 %v626, %v801
      %v811 = vadd.f32 %v810, %v718
      %v812 = vmul.f32 %v750, %v811
      %v813 = vsel %vm782, %v812, 0.0
      %v814 = vrot.slane %v813, 4
      %v815 = vadd.f32 %v813, %v814
      %v816 = vrot.slane %v815, 2
      %v817 = vadd.f32 %v815, %v816
      %v818 = vrot.slane %v817, 1
      %v819 = vadd.f32 %v817, %v818
      %v820 = vmul.f32 %v628, %v811
      %v821 = vadd.f32 %v820, %v719
      %v822 = vmul.f32 %v757, %v821
      %v823 = vsel %vm782, %v822, 0.0
      %v824 = vrot.slane %v823, 4
      %v825 = vadd.f32 %v823, %v824
      %v826 = vrot.slane %v825, 2
      %v827 = vadd.f32 %v825, %v826
      %v828 = vrot.slane %v827, 1
      %v829 = vadd.f32 %v827, %v828
      %v830 = vmul.f32 %v630, %v821
      %v831 = vadd.f32 %v830, %v720
      %v832 = vmul.f32 %v764, %v831
      %v833 = vsel %vm782, %v832, 0.0
      %v834 = vrot.slane %v833, 4
      %v835 = vadd.f32 %v833, %v834
      %v836 = vrot.slane %v835, 2
      %v837 = vadd.f32 %v835, %v836
      %v838 = vrot.slane %v837, 1
      %v839 = vadd.f32 %v837, %v838
      %v840 = vmul.f32 %v632, %v831
      %v841 = vadd.f32 %v840, %v721
      %v842 = vmul.f32 %v771, %v841
      %v843 = vsel %vm782, %v842, 0.0
      %v844 = vrot.slane %v843, 4
      %v845 = vadd.f32 %v843, %v844
      %v846 = vrot.slane %v845, 2
      %v847 = vadd.f32 %v845, %v846
      %v848 = vrot.slane %v847, 1
      %v849 = vadd.f32 %v847, %v848
      %v850 = vmul.f32 %v634, %v841
      %v851 = vadd.f32 %v850, %v722
      %v852 = vmul.f32 %v778, %v851
      %v853 = vsel %vm782, %v852, 0.0
      %v854 = vrot.slane %v853, 4
      %v855 = vadd.f32 %v853, %v854
      %v856 = vrot.slane %v855, 2
      %v857 = vadd.f32 %v855, %v856
      %v858 = vrot.slane %v857, 1
      %v859 = vadd.f32 %v857, %v858
      %vm860 = vcmask 1040384
      %v861 = vsel %vm860, %v789, %v799
      %vm862 = vcmask 1041408
      %v863 = vsel %vm862, %v861, %v809
      %vm864 = vcmask 1042432
      %v865 = vsel %vm864, %v863, %v819
      %vm866 = vcmask 1043456
      %v867 = vsel %vm866, %v865, %v829
      %vm868 = vcmask 1044480
      %v869 = vsel %vm868, %v867, %v839
      %vm870 = vcmask 1045504
      %v871 = vsel %vm870, %v869, %v849
      %vm872 = vcmask 1046528
      %v873 = vsel %vm872, %v871, %v859
      %v874 = vadd.f32 %v873, %v570
      %v875 = vmul.f32 %v874, %v582
      %v876 = vpack.c.bf16 %v875, %v875
      %vm877 = vcmask 519168
      %878 = vst.msk [vmem:[%s536] sm:$0xf] %vm877, %v876
      %879 = vst.msk [vmem:[#allocation2] sm:$0xff] %vm782, %v851
      %p880 = scmp.lt.s32.totalorder %s24, 1
      %s881 = scalar_select %p880, %s24, 1
      %p882 = scmp.lt.s32.totalorder %s26, 0
      %s883 = scalar_select %p882, %s26, 0
      %p884 = scmp.lt.s32.totalorder %s25, 0
      %s885 = scalar_select %p884, %s25, 0
      %s886 = sadd.s32 %s885, %s883
      %s887 = sadd.s32 %s886, %s881
      %s888 = smul.addr %s887, 4
      %s889 = scalar_lea.vmem %s8, %s888
      // Predicated region
      $region57: #{samba_forward.24} parent=51 // pred_check
        %p890 = pneg %p284
      $region58: #{samba_forward.24} parent=51 // pred_check_branch
        %892 = sbr.rel (%p890) target = $region60
      $region59: #{samba_forward.24} parent=51 // pred_region
        _
      $region60: #{samba_forward.24} parent=51 // pred_fallthru
        _
    $region52: #{samba_forward.24} parent=5 // pred_fallthru
      _
    %p893 = scmp.le.s32.totalorder 2, %s14
    // Predicated region
    $region61: #{samba_forward.24} parent=5 // pred_check
      %p894 = pneg %p893
    $region62: #{samba_forward.24} parent=5 // pred_check_branch
      %896 = sbr.rel (%p894) target = $region64
    $region63: #{samba_forward.24} parent=5 // pred_region
      %s897 = ssub.s32 %s14, 2
      // Predicated region
      $region65: #{samba_forward.24} parent=63 // pred_check
        %p898 = pneg %p290
      $region66: #{samba_forward.24} parent=63 // pred_check_branch
        %900 = sbr.rel (%p898) target = $region68
      $region67: #{samba_forward.24} parent=63 // pred_region
        %p901 = scmp.lt.s32.totalorder %s27, 1
        %s902 = scalar_select %p901, %s27, 1
        %p903 = scmp.lt.s32.totalorder %s29, 0
        %s904 = scalar_select %p903, %s29, 0
        %p905 = scmp.lt.s32.totalorder %s28, 0
        %s906 = scalar_select %p905, %s28, 0
        %s907 = sadd.s32 %s906, %s904
        %s908 = sadd.s32 %s907, %s902
        %s909 = smul.addr %s908, 4
        %s910 = scalar_lea.vmem %s8, %s909
      $region68: #{samba_forward.24} parent=63 // pred_fallthru
        _
    $region64: #{samba_forward.24} parent=5 // pred_fallthru
      _
  $region6: #{samba_forward.24} parent=0 // loop_footer
    %s18 = sadd.s32 1, %s14
  $region7: #{samba_forward.24} parent=0 // loop_footer_branch
    %13 = sbr.rel target = $region3
  $region8: #{samba_forward.24} parent=0 // loop_exit
    _

// kernel: split.11
$region0: #{split.11}
  #allocation0 [shape = 'u32[2048]{0}', space=vmem, size = 0x2000, scoped, tag = 'scoped memory for split.11']
  #allocation1 [shape = 'u32[2048]{0}', space=vmem, size = 0x2000, scoped, tag = 'scoped memory for split.11']
  #allocation2 [shape = 'u32[2048]{0}', space=vmem, size = 0x2000, scoped, tag = 'scoped memory for split.11']
  #allocation3 [shape = 'u32[2048]{0}', space=vmem, size = 0x2000, scoped, tag = 'scoped memory for split.11']
  #allocation4 [shape = 'u32[2048]{0}', space=vmem, size = 0x2000, scoped, tag = 'scoped memory for split.11']
  #allocation5 [shape = 's32[1]{0}', space=sflag, size = 0x4, scoped, tag = 'scoped memory for split.11']
  %s0 = inlined_call_operand.vmem [shape: f32[2,8,18], index: 0, kind: input, shape index: {}]
  %s1 = inlined_call_operand.vmem [shape: f32[2,8,7], index: 1, kind: output, shape index: {}]
  %v2 = vld [vmem:[%s0] sm:$0xff]
  %v3 = vlaneseq
  %v4 = vand.u32 %v3, 127
  %vm5 = vcmp.lt.s32.totalorder %v4, 11
  %v6 = vsel %vm5, 0, %v2
  %7 = vrot.lane.b32.xlu0 %v6, 117
  %v8 = vpop.permute.xlu0 %7
  %9 = vst [vmem:[%s1] sm:$0xff] %v8
  %s10 = scalar_lea.vmem %s0, 8
  %v11 = vld [vmem:[%s10] sm:$0xff]
  %v12 = vlaneseq
  %v13 = vand.u32 %v12, 127
  %vm14 = vcmp.lt.s32.totalorder %v13, 11
  %v15 = vsel %vm14, 0, %v11
  %16 = vrot.lane.b32.xlu0 %v15, 117
  %v17 = vpop.permute.xlu0 %16
  %s18 = scalar_lea.vmem %s1, 8
  %19 = vst [vmem:[%s18] sm:$0xff] %v17

// kernel: samba_forward.27
$region0: #{samba_forward.27}
  #allocation0 [shape = 'u32[]', space=smem, size = 0x4, offset = 0x4, fixed_abs, tag = 'smem constant byte address 0x4 - core index']
  #allocation1 [shape = 'u32[72,128]{1,0:T(1,128)}', space=vmem, size = 0x9000, scoped, tag = 'internal scratch']
  #allocation2 [shape = 'f32[16,128]{1,0:T(8,128)}', space=vmem, size = 0x2000, scoped, tag = 'scratch operand']
  %s0 = inlined_call_operand.vmem [shape: bf16[16,128], index: 0, kind: input, shape index: {}]
  %s1 = inlined_call_operand.vmem [shape: bf16[128,128], index: 1, kind: input, shape index: {}]
  %s2 = inlined_call_operand.vmem [shape: bf16[16,128], index: 2, kind: output, shape index: {}]
  %s3 = sld [smem:[#allocation0]]
  $region26: #{samba_forward.27} parent=0
    _
  %s5 = ssub.s32 1, %s3
  %s6 = scalar_select 0, %s5, %s3
  // Predicated region
  $region2: #{samba_forward.27} parent=0 // pred_check
    _
  $region3: #{samba_forward.27} parent=0 // pred_check_branch
    %8 = sbr.rel (0) target = $region5
  $region4: #{samba_forward.27} parent=0 // pred_region
    _
  $region5: #{samba_forward.27} parent=0 // pred_fallthru
    _
  // Predicated region
  $region6: #{samba_forward.27} parent=0 // pred_check
    _
  $region7: #{samba_forward.27} parent=0 // pred_check_branch
    %10 = sbr.rel (0) target = $region9
  $region8: #{samba_forward.27} parent=0 // pred_region
    _
  $region9: #{samba_forward.27} parent=0 // pred_fallthru
    _
  %p11 = scmp.eq.s32.totalorder 0, 0
  // Predicated region
  $region10: #{samba_forward.27} parent=0 // pred_check
    %p12 = pneg %p11
  $region11: #{samba_forward.27} parent=0 // pred_check_branch
    %14 = sbr.rel (%p12) target = $region13
  $region12: #{samba_forward.27} parent=0 // pred_region
    %15 = vst [vmem:[#allocation2] sm:$0xff] 0.0
    %16 = vst [vmem:[#allocation2 + $0x8] sm:$0xff] 0.0
  $region13: #{samba_forward.27} parent=0 // pred_fallthru
    _
  %v17 = vld [vmem:[#allocation2] sm:$0xff]
  %v18 = vld [vmem:[#allocation2 + $0x8] sm:$0xff]
  %v19 = vld [vmem:[%s0] sm:$0xf]
  %v20 = vld [vmem:[%s0 + $0x4] sm:$0xf]
  %v21 = vld [vmem:[%s1] sm:$0xf]
  %v22 = vld [vmem:[%s1 + $0x4] sm:$0xf]
  %v23 = vld [vmem:[%s1 + $0x8] sm:$0xf]
  %v24 = vld [vmem:[%s1 + $0xc] sm:$0xf]
  %v25 = vld [vmem:[%s1 + $0x10] sm:$0xf]
  %v26 = vld [vmem:[%s1 + $0x14] sm:$0xf]
  %v27 = vld [vmem:[%s1 + $0x18] sm:$0xf]
  %v28 = vld [vmem:[%s1 + $0x1c] sm:$0xf]
  %v29 = vld [vmem:[%s1 + $0x20] sm:$0xf]
  %v30 = vld [vmem:[%s1 + $0x24] sm:$0xf]
  %v31 = vld [vmem:[%s1 + $0x28] sm:$0xf]
  %v32 = vld [vmem:[%s1 + $0x2c] sm:$0xf]
  %v33 = vld [vmem:[%s1 + $0x30] sm:$0xf]
  %v34 = vld [vmem:[%s1 + $0x34] sm:$0xf]
  %v35 = vld [vmem:[%s1 + $0x38] sm:$0xf]
  %v36 = vld [vmem:[%s1 + $0x3c] sm:$0xf]
  %v39 = vunpack.c.l.b16 %v19
  %v40 = vunpack.c.l.b16 %v20
  %v41 = vpack.c.b16 %v40, %v39
  %v59 = vunpack.c.l.b16 %v21
  %v60 = vunpack.c.l.b16 %v22
  %v61 = vunpack.c.l.b16 %v23
  %v62 = vunpack.c.l.b16 %v24
  %v63 = vunpack.c.l.b16 %v25
  %v64 = vunpack.c.l.b16 %v26
  %v65 = vunpack.c.l.b16 %v27
  %v66 = vunpack.c.l.b16 %v28
  %v67 = vunpack.c.l.b16 %v29
  %v68 = vunpack.c.l.b16 %v30
  %v69 = vunpack.c.l.b16 %v31
  %v70 = vunpack.c.l.b16 %v32
  %v71 = vunpack.c.l.b16 %v33
  %v72 = vunpack.c.l.b16 %v34
  %v73 = vunpack.c.l.b16 %v35
  %v74 = vunpack.c.l.b16 %v36
  %v75 = vpack.c.b16 %v60, %v59
  %v76 = vpack.c.b16 %v62, %v61
  %v77 = vpack.c.b16 %v64, %v63
  %v78 = vpack.c.b16 %v66, %v65
  %v79 = vpack.c.b16 %v68, %v67
  %v80 = vpack.c.b16 %v70, %v69
  %v81 = vpack.c.b16 %v72, %v71
  %v82 = vpack.c.b16 %v74, %v73
  %91 = vmatpush.bf16.msra.mxu0 %v82
  %92 = vmatpush.bf16.msra.mxu0 %v81
  %93 = vmatpush.bf16.msra.mxu0 %v80
  %94 = vmatpush.bf16.msra.mxu0 %v79
  %95 = vmatpush.bf16.msra.mxu0 %v78
  %96 = vmatpush.bf16.msra.mxu0 %v77
  %97 = vmatpush.bf16.msra.mxu0 %v76
  %98 = vmatpush.bf16.msra.mxu0 %v75
  %99 = vmatmul.bf16.gmra.mxu0 %v41
  %v100 = vpop.f32.mrf.mxu0
  %v101 = vadd.f32 0.0, %v100
  %v102 = vpop.f32.mrf.mxu0
  %v103 = vadd.f32 0.0, %v102
  %104 = vdwg.mxu0
  %v105 = vadd.f32 %v17, %v101
  %v106 = vadd.f32 %v18, %v103
  %107 = vst [vmem:[#allocation2] sm:$0xff] %v105
  %108 = vst [vmem:[#allocation2 + $0x8] sm:$0xff] %v106
  // Predicated region
  $region14: #{samba_forward.27} parent=0 // pred_check
    %p109 = pneg %p11
  $region15: #{samba_forward.27} parent=0 // pred_check_branch
    %111 = sbr.rel (%p109) target = $region17
  $region16: #{samba_forward.27} parent=0 // pred_region
    %v112 = vld [vmem:[#allocation2] sm:$0xff]
    %v113 = vld [vmem:[#allocation2 + $0x8] sm:$0xff]
    %v114 = vmax.f32 %v112, 0.0
    %v115 = vmax.f32 %v113, 0.0
    %v116 = vpack.c.bf16 %v114, %v114
    %v117 = vpack.c.bf16 %v115, %v115
    %118 = vst [vmem:[%s2] sm:$0xf] %v116
    %119 = vst [vmem:[%s2 + $0x4] sm:$0xf] %v117
  $region17: #{samba_forward.27} parent=0 // pred_fallthru
    _
  // Predicated region
  $region18: #{samba_forward.27} parent=0 // pred_check
    _
  $region19: #{samba_forward.27} parent=0 // pred_check_branch
    %121 = sbr.rel (0) target = $region21
  $region20: #{samba_forward.27} parent=0 // pred_region
    _
  $region21: #{samba_forward.27} parent=0 // pred_fallthru
    _
  // Predicated region
  $region22: #{samba_forward.27} parent=0 // pred_check
    _
  $region23: #{samba_forward.27} parent=0 // pred_check_branch
    %123 = sbr.rel (0) target = $region25
  $region24: #{samba_forward.27} parent=0 // pred_region
    _
  $region25: #{samba_forward.27} parent=0 // pred_fallthru
    _

// kernel: samba_forward.25
$region0: #{samba_forward.25}
  #allocation0 [shape = 'u32[]', space=smem, size = 0x4, offset = 0x4, fixed_abs, tag = 'smem constant byte address 0x4 - core index']
  #allocation1 [shape = 'u32[72,128]{1,0:T(1,128)}', space=vmem, size = 0x9000, scoped, tag = 'internal scratch']
  #allocation2 [shape = 'f32[16,128]{1,0:T(8,128)}', space=vmem, size = 0x2000, scoped, tag = 'scratch operand']
  %s0 = inlined_call_operand.vmem [shape: bf16[16,128], index: 0, kind: input, shape index: {}]
  %s1 = inlined_call_operand.vmem [shape: bf16[128,128], index: 1, kind: input, shape index: {}]
  %s2 = inlined_call_operand.vmem [shape: f32[16,128], index: 2, kind: input, shape index: {}]
  %s3 = inlined_call_operand.vmem [shape: f32[16,128], index: 3, kind: output, shape index: {}]
  %s4 = sld [smem:[#allocation0]]
  $region30: #{samba_forward.25} parent=0
    _
  %s6 = ssub.s32 1, %s4
  %s7 = scalar_select 0, %s6, %s4
  // Predicated region
  $region2: #{samba_forward.25} parent=0 // pred_check
    _
  $region3: #{samba_forward.25} parent=0 // pred_check_branch
    %9 = sbr.rel (0) target = $region5
  $region4: #{samba_forward.25} parent=0 // pred_region
    _
  $region5: #{samba_forward.25} parent=0 // pred_fallthru
    _
  // Predicated region
  $region6: #{samba_forward.25} parent=0 // pred_check
    _
  $region7: #{samba_forward.25} parent=0 // pred_check_branch
    %11 = sbr.rel (0) target = $region9
  $region8: #{samba_forward.25} parent=0 // pred_region
    _
  $region9: #{samba_forward.25} parent=0 // pred_fallthru
    _
  // Predicated region
  $region10: #{samba_forward.25} parent=0 // pred_check
    _
  $region11: #{samba_forward.25} parent=0 // pred_check_branch
    %13 = sbr.rel (0) target = $region13
  $region12: #{samba_forward.25} parent=0 // pred_region
    _
  $region13: #{samba_forward.25} parent=0 // pred_fallthru
    _
  %p14 = scmp.eq.s32.totalorder 0, 0
  // Predicated region
  $region14: #{samba_forward.25} parent=0 // pred_check
    %p15 = pneg %p14
  $region15: #{samba_forward.25} parent=0 // pred_check_branch
    %17 = sbr.rel (%p15) target = $region17
  $region16: #{samba_forward.25} parent=0 // pred_region
    %18 = vst [vmem:[#allocation2] sm:$0xff] 0.0
    %19 = vst [vmem:[#allocation2 + $0x8] sm:$0xff] 0.0
  $region17: #{samba_forward.25} parent=0 // pred_fallthru
    _
  %v20 = vld [vmem:[#allocation2] sm:$0xff]
  %v21 = vld [vmem:[#allocation2 + $0x8] sm:$0xff]
  %v22 = vld [vmem:[%s0] sm:$0xf]
  %v23 = vld [vmem:[%s0 + $0x4] sm:$0xf]
  %v24 = vld [vmem:[%s1] sm:$0xf]
  %v25 = vld [vmem:[%s1 + $0x4] sm:$0xf]
  %v26 = vld [vmem:[%s1 + $0x8] sm:$0xf]
  %v27 = vld [vmem:[%s1 + $0xc] sm:$0xf]
  %v28 = vld [vmem:[%s1 + $0x10] sm:$0xf]
  %v29 = vld [vmem:[%s1 + $0x14] sm:$0xf]
  %v30 = vld [vmem:[%s1 + $0x18] sm:$0xf]
  %v31 = vld [vmem:[%s1 + $0x1c] sm:$0xf]
  %v32 = vld [vmem:[%s1 + $0x20] sm:$0xf]
  %v33 = vld [vmem:[%s1 + $0x24] sm:$0xf]
  %v34 = vld [vmem:[%s1 + $0x28] sm:$0xf]
  %v35 = vld [vmem:[%s1 + $0x2c] sm:$0xf]
  %v36 = vld [vmem:[%s1 + $0x30] sm:$0xf]
  %v37 = vld [vmem:[%s1 + $0x34] sm:$0xf]
  %v38 = vld [vmem:[%s1 + $0x38] sm:$0xf]
  %v39 = vld [vmem:[%s1 + $0x3c] sm:$0xf]
  %v42 = vunpack.c.l.b16 %v22
  %v43 = vunpack.c.l.b16 %v23
  %v44 = vpack.c.b16 %v43, %v42
  %v62 = vunpack.c.l.b16 %v24
  %v63 = vunpack.c.l.b16 %v25
  %v64 = vunpack.c.l.b16 %v26
  %v65 = vunpack.c.l.b16 %v27
  %v66 = vunpack.c.l.b16 %v28
  %v67 = vunpack.c.l.b16 %v29
  %v68 = vunpack.c.l.b16 %v30
  %v69 = vunpack.c.l.b16 %v31
  %v70 = vunpack.c.l.b16 %v32
  %v71 = vunpack.c.l.b16 %v33
  %v72 = vunpack.c.l.b16 %v34
  %v73 = vunpack.c.l.b16 %v35
  %v74 = vunpack.c.l.b16 %v36
  %v75 = vunpack.c.l.b16 %v37
  %v76 = vunpack.c.l.b16 %v38
  %v77 = vunpack.c.l.b16 %v39
  %v78 = vpack.c.b16 %v63, %v62
  %v79 = vpack.c.b16 %v65, %v64
  %v80 = vpack.c.b16 %v67, %v66
  %v81 = vpack.c.b16 %v69, %v68
  %v82 = vpack.c.b16 %v71, %v70
  %v83 = vpack.c.b16 %v73, %v72
  %v84 = vpack.c.b16 %v75, %v74
  %v85 = vpack.c.b16 %v77, %v76
  %94 = vmatpush.bf16.msra.mxu0 %v85
  %95 = vmatpush.bf16.msra.mxu0 %v84
  %96 = vmatpush.bf16.msra.mxu0 %v83
  %97 = vmatpush.bf16.msra.mxu0 %v82
  %98 = vmatpush.bf16.msra.mxu0 %v81
  %99 = vmatpush.bf16.msra.mxu0 %v80
  %100 = vmatpush.bf16.msra.mxu0 %v79
  %101 = vmatpush.bf16.msra.mxu0 %v78
  %102 = vmatmul.bf16.gmra.mxu0 %v44
  %v103 = vpop.f32.mrf.mxu0
  %v104 = vadd.f32 0.0, %v103
  %v105 = vpop.f32.mrf.mxu0
  %v106 = vadd.f32 0.0, %v105
  %107 = vdwg.mxu0
  %v108 = vadd.f32 %v20, %v104
  %v109 = vadd.f32 %v21, %v106
  %110 = vst [vmem:[#allocation2] sm:$0xff] %v108
  %111 = vst [vmem:[#allocation2 + $0x8] sm:$0xff] %v109
  // Predicated region
  $region18: #{samba_forward.25} parent=0 // pred_check
    %p112 = pneg %p14
  $region19: #{samba_forward.25} parent=0 // pred_check_branch
    %114 = sbr.rel (%p112) target = $region21
  $region20: #{samba_forward.25} parent=0 // pred_region
    %v115 = vld [vmem:[#allocation2] sm:$0xff]
    %v116 = vld [vmem:[#allocation2 + $0x8] sm:$0xff]
    %v117 = vld [vmem:[%s2] sm:$0xff]
    %v118 = vld [vmem:[%s2 + $0x8] sm:$0xff]
    %v119 = vadd.f32 %v115, %v117
    %v120 = vadd.f32 %v116, %v118
    %121 = vst [vmem:[%s3] sm:$0xff] %v119
    %122 = vst [vmem:[%s3 + $0x8] sm:$0xff] %v120
  $region21: #{samba_forward.25} parent=0 // pred_fallthru
    _
  // Predicated region
  $region22: #{samba_forward.25} parent=0 // pred_check
    _
  $region23: #{samba_forward.25} parent=0 // pred_check_branch
    %124 = sbr.rel (0) target = $region25
  $region24: #{samba_forward.25} parent=0 // pred_region
    _
  $region25: #{samba_forward.25} parent=0 // pred_fallthru
    _
  // Predicated region
  $region26: #{samba_forward.25} parent=0 // pred_check
    _
  $region27: #{samba_forward.25} parent=0 // pred_check_branch
    %126 = sbr.rel (0) target = $region29
  $region28: #{samba_forward.25} parent=0 // pred_region
    _
  $region29: #{samba_forward.25} parent=0 // pred_fallthru
    _

// kernel: samba_forward.39
$region0: #{samba_forward.39}
  #allocation0 [shape = 'u32[]', space=smem, size = 0x4, offset = 0x4, fixed_abs, tag = 'smem constant byte address 0x4 - core index']
  #allocation1 [shape = 'u32[72,128]{1,0:T(1,128)}', space=vmem, size = 0x9000, scoped, tag = 'internal scratch']
  #allocation2 [shape = 'f32[16,128]{1,0:T(8,128)}', space=vmem, size = 0x2000, scoped, tag = 'scratch operand']
  %s0 = inlined_call_operand.vmem [shape: bf16[16,128], index: 0, kind: input, shape index: {}]
  %s1 = inlined_call_operand.vmem [shape: bf16[128,128], index: 1, kind: input, shape index: {}]
  %s2 = inlined_call_operand.vmem [shape: f32[1,128], index: 2, kind: input, shape index: {}]
  %s3 = inlined_call_operand.vmem [shape: f32[16,128], index: 3, kind: output, shape index: {}]
  %s4 = sld [smem:[#allocation0]]
  $region30: #{samba_forward.39} parent=0
    _
  %s6 = ssub.s32 1, %s4
  %s7 = scalar_select 0, %s6, %s4
  // Predicated region
  $region2: #{samba_forward.39} parent=0 // pred_check
    _
  $region3: #{samba_forward.39} parent=0 // pred_check_branch
    %9 = sbr.rel (0) target = $region5
  $region4: #{samba_forward.39} parent=0 // pred_region
    _
  $region5: #{samba_forward.39} parent=0 // pred_fallthru
    _
  // Predicated region
  $region6: #{samba_forward.39} parent=0 // pred_check
    _
  $region7: #{samba_forward.39} parent=0 // pred_check_branch
    %11 = sbr.rel (0) target = $region9
  $region8: #{samba_forward.39} parent=0 // pred_region
    _
  $region9: #{samba_forward.39} parent=0 // pred_fallthru
    _
  // Predicated region
  $region10: #{samba_forward.39} parent=0 // pred_check
    _
  $region11: #{samba_forward.39} parent=0 // pred_check_branch
    %13 = sbr.rel (0) target = $region13
  $region12: #{samba_forward.39} parent=0 // pred_region
    _
  $region13: #{samba_forward.39} parent=0 // pred_fallthru
    _
  %p14 = scmp.eq.s32.totalorder 0, 0
  // Predicated region
  $region14: #{samba_forward.39} parent=0 // pred_check
    %p15 = pneg %p14
  $region15: #{samba_forward.39} parent=0 // pred_check_branch
    %17 = sbr.rel (%p15) target = $region17
  $region16: #{samba_forward.39} parent=0 // pred_region
    %18 = vst [vmem:[#allocation2] sm:$0xff] 0.0
    %19 = vst [vmem:[#allocation2 + $0x8] sm:$0xff] 0.0
  $region17: #{samba_forward.39} parent=0 // pred_fallthru
    _
  %v20 = vld [vmem:[#allocation2] sm:$0xff]
  %v21 = vld [vmem:[#allocation2 + $0x8] sm:$0xff]
  %v22 = vld [vmem:[%s0] sm:$0xf]
  %v23 = vld [vmem:[%s0 + $0x4] sm:$0xf]
  %v24 = vld [vmem:[%s1] sm:$0xf]
  %v25 = vld [vmem:[%s1 + $0x4] sm:$0xf]
  %v26 = vld [vmem:[%s1 + $0x8] sm:$0xf]
  %v27 = vld [vmem:[%s1 + $0xc] sm:$0xf]
  %v28 = vld [vmem:[%s1 + $0x10] sm:$0xf]
  %v29 = vld [vmem:[%s1 + $0x14] sm:$0xf]
  %v30 = vld [vmem:[%s1 + $0x18] sm:$0xf]
  %v31 = vld [vmem:[%s1 + $0x1c] sm:$0xf]
  %v32 = vld [vmem:[%s1 + $0x20] sm:$0xf]
  %v33 = vld [vmem:[%s1 + $0x24] sm:$0xf]
  %v34 = vld [vmem:[%s1 + $0x28] sm:$0xf]
  %v35 = vld [vmem:[%s1 + $0x2c] sm:$0xf]
  %v36 = vld [vmem:[%s1 + $0x30] sm:$0xf]
  %v37 = vld [vmem:[%s1 + $0x34] sm:$0xf]
  %v38 = vld [vmem:[%s1 + $0x38] sm:$0xf]
  %v39 = vld [vmem:[%s1 + $0x3c] sm:$0xf]
  %v42 = vunpack.c.l.b16 %v22
  %v43 = vunpack.c.l.b16 %v23
  %v44 = vpack.c.b16 %v43, %v42
  %v62 = vunpack.c.l.b16 %v24
  %v63 = vunpack.c.l.b16 %v25
  %v64 = vunpack.c.l.b16 %v26
  %v65 = vunpack.c.l.b16 %v27
  %v66 = vunpack.c.l.b16 %v28
  %v67 = vunpack.c.l.b16 %v29
  %v68 = vunpack.c.l.b16 %v30
  %v69 = vunpack.c.l.b16 %v31
  %v70 = vunpack.c.l.b16 %v32
  %v71 = vunpack.c.l.b16 %v33
  %v72 = vunpack.c.l.b16 %v34
  %v73 = vunpack.c.l.b16 %v35
  %v74 = vunpack.c.l.b16 %v36
  %v75 = vunpack.c.l.b16 %v37
  %v76 = vunpack.c.l.b16 %v38
  %v77 = vunpack.c.l.b16 %v39
  %v78 = vpack.c.b16 %v63, %v62
  %v79 = vpack.c.b16 %v65, %v64
  %v80 = vpack.c.b16 %v67, %v66
  %v81 = vpack.c.b16 %v69, %v68
  %v82 = vpack.c.b16 %v71, %v70
  %v83 = vpack.c.b16 %v73, %v72
  %v84 = vpack.c.b16 %v75, %v74
  %v85 = vpack.c.b16 %v77, %v76
  %94 = vmatpush.bf16.msra.mxu0 %v85
  %95 = vmatpush.bf16.msra.mxu0 %v84
  %96 = vmatpush.bf16.msra.mxu0 %v83
  %97 = vmatpush.bf16.msra.mxu0 %v82
  %98 = vmatpush.bf16.msra.mxu0 %v81
  %99 = vmatpush.bf16.msra.mxu0 %v80
  %100 = vmatpush.bf16.msra.mxu0 %v79
  %101 = vmatpush.bf16.msra.mxu0 %v78
  %102 = vmatmul.bf16.gmra.mxu0 %v44
  %v103 = vpop.f32.mrf.mxu0
  %v104 = vadd.f32 0.0, %v103
  %v105 = vpop.f32.mrf.mxu0
  %v106 = vadd.f32 0.0, %v105
  %107 = vdwg.mxu0
  %v108 = vadd.f32 %v20, %v104
  %v109 = vadd.f32 %v21, %v106
  %110 = vst [vmem:[#allocation2] sm:$0xff] %v108
  %111 = vst [vmem:[#allocation2 + $0x8] sm:$0xff] %v109
  // Predicated region
  $region18: #{samba_forward.39} parent=0 // pred_check
    %p112 = pneg %p14
  $region19: #{samba_forward.39} parent=0 // pred_check_branch
    %114 = sbr.rel (%p112) target = $region21
  $region20: #{samba_forward.39} parent=0 // pred_region
    %v115 = vld [vmem:[#allocation2] sm:$0xff]
    %v116 = vld [vmem:[#allocation2 + $0x8] sm:$0xff]
    %v117 = vld [vmem:[%s2] sm:$0x1]
    %v119 = vperm.slane %v117, 0
    %v121 = vadd.f32 %v115, %v119
    %v122 = vadd.f32 %v116, %v119
    %123 = vst [vmem:[%s3] sm:$0xff] %v121
    %124 = vst [vmem:[%s3 + $0x8] sm:$0xff] %v122
  $region21: #{samba_forward.39} parent=0 // pred_fallthru
    _
  // Predicated region
  $region22: #{samba_forward.39} parent=0 // pred_check
    _
  $region23: #{samba_forward.39} parent=0 // pred_check_branch
    %126 = sbr.rel (0) target = $region25
  $region24: #{samba_forward.39} parent=0 // pred_region
    _
  $region25: #{samba_forward.39} parent=0 // pred_fallthru
    _
  // Predicated region
  $region26: #{samba_forward.39} parent=0 // pred_check
    _
  $region27: #{samba_forward.39} parent=0 // pred_check_branch
    %128 = sbr.rel (0) target = $region29
  $region28: #{samba_forward.39} parent=0 // pred_region
    _
  $region29: #{samba_forward.39} parent=0 // pred_fallthru
    _

</llo_original>
